<compile_context>
chip_gen: v7x
topology: tpu7x:2x2x1
jax: 0.10.0
libtpu: 0.0.40
codegen_flags: <defaults>
</compile_context>

<pallas_src>
import functools

import numpy as np
import jax
import jax.numpy as jnp
from jax import lax
from jax.experimental import pallas as pl
from jax.experimental.pallas import tpu as pltpu

_LANE = 128
_SUBLANE = 8
_HALO = 8   # strip halo rows; total vertical receptive radius is 4, 8 keeps alignment

# scipy.signal.gaussian(5, std=1.0), unnormalized, exactly as in CandyNet.__init__
# (symmetric, centre weight is exactly 1.0 so the centre tap needs no multiply)
_G1 = float(np.exp(-0.5))        # taps at +-1
_G2 = float(np.exp(-2.0))        # taps at +-2
_TAN22_5 = float(np.tan(np.pi / 8.0))


def _candy_kernel(img_hbm, out_ref, in_buf, dma_sem, *,
                  tb, th, th_in, n_strips, h_true, w_true, w_pad, threshold):
    b = pl.program_id(0)         # batch-block index ("parallel": megacore-sharded)
    s = pl.program_id(1)         # row-strip index  ("arbitrary": sequential per core)
    slot = s % 2

    def start_copy(strip, buf_slot):
        row0 = pl.multiple_of(strip * th, _SUBLANE)
        pltpu.make_async_copy(
            img_hbm.at[pl.ds(b * tb, tb), :, pl.ds(row0, th_in), :],
            in_buf.at[buf_slot], dma_sem.at[buf_slot]).start()

    # Double-buffered strip fetch: issue this batch-block's first strip at
    # s == 0, then prefetch strip s+1 while computing strip s.  The prefetch
    # never crosses the parallel batch axis, so each core's chain is complete.
    if n_strips == 1:
        start_copy(0, 0)
    else:
        @pl.when(s == 0)
        def _():
            start_copy(0, 0)

        @pl.when(s < n_strips - 1)
        def _():
            start_copy(s + 1, (s + 1) % 2)

    pltpu.make_async_copy(
        img_hbm.at[pl.ds(b * tb, tb), :,
                   pl.ds(pl.multiple_of(s * th, _SUBLANE), th_in), :],
        in_buf.at[slot], dma_sem.at[slot]).wait()

    # valid(i, j) <=> strip cell (i, j) lies inside the true image.  One mask
    # per strip replaces the old per-shift border selects: per-stage conv zero
    # padding is reproduced by the >= 2 zero pad columns / >= HALO zero pad
    # rows already present in HBM plus re-zeroing `bl` and `grad_mag` below.
    row = lax.broadcasted_iota(jnp.int32, (th_in, 1), 0) + (s * th - _HALO)
    col = lax.broadcasted_iota(jnp.int32, (1, w_pad), 1)
    valid = jnp.logical_and(jnp.logical_and(row >= 0, row < h_true), col < w_true)

    def sh(x, k):   # out(i, j) = x(i, j + k)  (lane roll; wraps into zero pad cols)
        return pltpu.roll(x, (-k) % w_pad, axis=1)

    def sv(x, k):   # out(i, j) = x(i + k, j)  (sublane roll; halo >= 4 keeps output exact)
        return pltpu.roll(x, (-k) % th_in, axis=0)

    for t in range(tb):          # tb <= 2: bounded static unroll
        grad_mag = None
        gx_sum = None
        gy_sum = None
        for ch in range(3):      # R, G, B
            x = in_buf[slot, t, ch, :, :].astype(jnp.float32)
            # 5-tap separable gaussian (centre weight exactly 1.0).
            bh = (x + _G1 * (sh(x, -1) + sh(x, 1))
                    + _G2 * (sh(x, -2) + sh(x, 2)))
            bl = (bh + _G1 * (sv(bh, -1) + sv(bh, 1))
                     + _G2 * (sv(bh, -2) + sv(bh, 2)))
            # bl is consumed by both sobels with per-stage zero padding -> zero
            # it outside the true image (the only per-channel border select).
            bl = jnp.where(valid, bl, 0.0)
            # Separable 3x3 sobel; |w| in {1, 2} -> adds only, no multiplies.
            dh = sh(bl, -1) - sh(bl, 1)            # bl(j-1) - bl(j+1)
            dv = sv(bl, -1) - sv(bl, 1)            # bl(i-1) - bl(i+1)
            gx = sv(dh, -1) + (dh + dh) + sv(dh, 1)
            gy = sh(dv, -1) + (dv + dv) + sh(dv, 1)
            mag = jnp.sqrt(gx * gx + gy * gy)
            grad_mag = mag if grad_mag is None else grad_mag + mag
            gx_sum = gx if gx_sum is None else gx_sum + gx
            gy_sum = gy if gy_sum is None else gy_sum + gy

        # NOTE: the PyTorch forward also builds `blurred_img` via torch.stack
        # but never uses or returns it -> dead code, omitted here.

        # Directional filter zero-pads grad_mag -> zero it outside the image
        # once (single border select per image) before the neighbour shifts.
        gm = jnp.where(valid, grad_mag, 0.0)

        # ---- 4-axis non-maximum suppression: the torch 8-channel gather only
        # ---- feeds min(pos, neg) > 0, i.e. gm must exceed both neighbours
        # ---- along the gradient axis -> per-axis max + 3-level select. ------
        e_ = sh(gm, 1)                 # ( 0, +1)
        w_ = sh(gm, -1)                # ( 0, -1)
        s_ = sv(gm, 1)                 # (+1,  0)
        n_ = sv(gm, -1)                # (-1,  0)
        se = sv(e_, 1)                 # (+1, +1)
        ne = sv(e_, -1)                # (-1, +1)
        sw = sv(w_, 1)                 # (+1, -1)
        nw = sv(w_, -1)                # (-1, -1)

        m_h = jnp.maximum(e_, w_)      # orientation bins {0, 4}
        m_v = jnp.maximum(s_, n_)      # orientation bins {2, 6}
        m_d1 = jnp.maximum(se, nw)     # orientation bins {1, 5}
        m_d2 = jnp.maximum(sw, ne)     # orientation bins {3, 7}

        # Orientation bin = round((atan2(gy, gx)*180/3.14159 + 180)/45) % 8,
        # realised with sign / slope comparisons against tan(22.5 deg).
        # TODO(synk): differs from torch only on exact 22.5deg + 45deg*k bin
        # edges and exact-zero gradients (tie picks a different diagonal).
        ax = jnp.abs(gx_sum)
        ay = jnp.abs(gy_sum)
        near_h = ay <= _TAN22_5 * ax
        near_v = ax < _TAN22_5 * ay
        same_sign = (gy_sum > 0.0) == (gx_sum > 0.0)
        nbr_max = jnp.where(near_h, m_h,
                            jnp.where(near_v, m_v,
                                      jnp.where(same_sign, m_d1, m_d2)))

        keep = jnp.logical_and(gm > nbr_max, gm >= threshold)
        result = jnp.where(keep, gm, 0.0)

        # Static, sublane-aligned slice of the th output rows; lane-dense store.
        out_ref[t, 0, :, :] = result[_HALO:_HALO + th, :]


def _round_up(x, m):
    return (x + m - 1) // m * m


def _cdiv(a, b):
    return -(-a // b)


def _vmem_capacity_bytes():
    try:
        return int(pltpu.get_tpu_info().vmem_capacity_bytes)
    except Exception:                 # be conservative if the query is unavailable
        return 64 * 1024 * 1024


def _choose_tiling(n, h, w_pad):
    """Generation-aware (strip rows, strip input rows, #strips, imgs/step, vmem limit)."""
    vmem_cap = _vmem_capacity_bytes()
    if vmem_cap >= 96 * 1024 * 1024:      # v5e / v6e: 128 MiB VMEM -> tall strips
        max_plane_elems, th_cap, vmem_limit = 512 * 1024, 512, 100 * 1024 * 1024
    else:                                 # v7x: 64 MiB VMEM -> smaller budget
        max_plane_elems, th_cap, vmem_limit = 128 * 1024, 160, 40 * 1024 * 1024

    th_max = max(_SUBLANE,
                 min(th_cap, (max_plane_elems // w_pad) // _SUBLANE * _SUBLANE))
    n_strips = max(1, _cdiv(h, th_max))          # balanced strips, no all-pad strips
    th = _round_up(_cdiv(h, n_strips), _SUBLANE)
    th_in = th + 2 * _HALO

    # Batch small images per grid step to amortize per-step overhead, but cap
    # at 2 (bounded unroll live ranges) and keep >= 2 grid steps so v7x's two
    # TensorCores both get work.
    tb = 1
    if (n_strips == 1 and n >= 4 and n % 2 == 0
            and 2 * 3 * th_in * w_pad <= max_plane_elems):
        tb = 2
    return th, th_in, n_strips, tb, vmem_limit


def candy_net(img, threshold=10.0):
    """Pallas implementation of CandyNet.forward. img: (N, >=3, H, W) NCHW."""
    n, c, h, w = img.shape
    assert c >= 3, "CandyNet expects an RGB input"
    if c != 3:
        img = img[:, :3]                         # forward only uses channels 0..2

    # Lane-dense last dim with >= 2 guaranteed zero pad columns (the roll-based
    # shifts wrap into these instead of needing per-shift border masks).
    w_pad = _round_up(w, _LANE)
    if w_pad - w < 2:
        w_pad += _LANE

    th, th_in, n_strips, tb, vmem_limit = _choose_tiling(n, h, w_pad)
    h_out = n_strips * th
    h_tot = h_out + 2 * _HALO                    # HALO zero rows above and below

    # TODO(synk): for H/W far from (8,128) multiples this wrapper pad + final
    # slice is one extra HBM pass; a masked-tail-store kernel would avoid it.
    img_p = jnp.pad(img, ((0, 0), (0, 0),
                          (_HALO, h_tot - _HALO - h), (0, w_pad - w)))

    kernel = functools.partial(
        _candy_kernel, tb=tb, th=th, th_in=th_in, n_strips=n_strips,
        h_true=h, w_true=w, w_pad=w_pad, threshold=float(threshold))

    out = pl.pallas_call(
        kernel,
        out_shape=jax.ShapeDtypeStruct((n, 1, h_out, w_pad), jnp.float32),
        grid=(n // tb, n_strips),
        in_specs=[pl.BlockSpec(memory_space=pl.ANY)],
        out_specs=pl.BlockSpec((tb, 1, th, w_pad), lambda b, s: (b, 0, s, 0)),
        scratch_shapes=[
            pltpu.VMEM((2, tb, 3, th_in, w_pad), img_p.dtype),   # double-buffered strip
            pltpu.SemaphoreType.DMA((2,)),
        ],
        compiler_params=pltpu.CompilerParams(
            dimension_semantics=("parallel", "arbitrary"),
            vmem_limit_bytes=vmem_limit),
    )(img_p)
    return out[:, :, :h, :w]


if __name__ == "__main__":
    key = jax.random.PRNGKey(0)
    img = jax.random.uniform(key, (2, 3, 16, 16), dtype=jnp.float32) * 255.0
    out = jax.block_until_ready(candy_net(img, threshold=10.0))
    assert out.shape == (2, 1, 16, 16), out.shape
    assert bool(jnp.all(jnp.isfinite(out)))
    print("KERNEL_OK")
</pallas_src>

<mosaic_0001>
module attributes {stable_mosaic.version = 11 : i64} {
  func.func @_candy_kernel(%arg0: i32, %arg1: i32, %arg2: memref<2x3x32x128xf32, #tpu.memory_space<any>>, %arg3: memref<1x1x16x128xf32, #tpu.memory_space<vmem>>, %arg4: memref<2x1x3x32x128xf32, #tpu.memory_space<vmem>>, %arg5: memref<2x!tpu.dma_semaphore, #tpu.memory_space<semaphore_mem>>) attributes {dimension_semantics = [#tpu.dimension_semantics<parallel>, #tpu.dimension_semantics<arbitrary>], iteration_bounds = array<i64: 2, 1>, scalar_prefetch = 0 : i64, scratch_operands = 2 : i64, tpu.core_type = #tpu.core_type<tc>, window_params = [{}, {transform_indices = @transform_1, window_bounds = array<i64: 1, 1, 16, 128>}]} {
    %c2_i32 = arith.constant 2 : i32
    %c0_i32 = arith.constant 0 : i32
    %0 = arith.cmpi eq, %c2_i32, %c0_i32 : i32
    %c1_i32 = arith.constant 1 : i32
    %1 = arith.select %0, %c1_i32, %c2_i32 : i32
    %2 = arith.remsi %arg1, %1 : i32
    %c0_i32_0 = arith.constant 0 : i32
    %3 = arith.cmpi ne, %2, %c0_i32_0 : i32
    %c0_i32_1 = arith.constant 0 : i32
    %4 = arith.cmpi slt, %2, %c0_i32_1 : i32
    %c0_i32_2 = arith.constant 0 : i32
    %5 = arith.cmpi slt, %1, %c0_i32_2 : i32
    %6 = arith.xori %4, %5 : i1
    %7 = arith.andi %6, %3 : i1
    %8 = arith.addi %2, %1 : i32
    %9 = arith.select %7, %8, %2 : i32
    %c0_i32_3 = arith.constant 0 : i32
    %10 = tpu.assume_multiple %c0_i32_3, 8 : i32
    %c1_i32_4 = arith.constant 1 : i32
    %11 = arith.muli %arg0, %c1_i32_4 : i32
    %c0_i32_5 = arith.constant 0 : i32
    %c0_i32_6 = arith.constant 0 : i32
    %c0_i32_7 = arith.constant 0 : i32
    %c0_i32_8 = arith.constant 0 : i32
    %12 = tpu.memref_slice %arg2[%11, %c0_i32_7, %10, %c0_i32_8] : memref<2x3x32x128xf32, #tpu.memory_space<any>> -> memref<1x3x32x128xf32, #tpu.memory_space<any>>
    %c0_i32_9 = arith.constant 0 : i32
    %c0_i32_10 = arith.constant 0 : i32
    %c0_i32_11 = arith.constant 0 : i32
    %c0_i32_12 = arith.constant 0 : i32
    %13 = tpu.memref_slice %arg4[%c0_i32_5, %c0_i32_9, %c0_i32_10, %c0_i32_11, %c0_i32_12] : memref<2x1x3x32x128xf32, #tpu.memory_space<vmem>> -> memref<1x1x3x32x128xf32, #tpu.memory_space<vmem>>
    %14 = tpu.memref_squeeze %13 : memref<1x1x3x32x128xf32, #tpu.memory_space<vmem>> -> memref<1x3x32x128xf32, #tpu.memory_space<vmem>>
    %15 = tpu.memref_slice %arg5[%c0_i32_6] : memref<2x!tpu.dma_semaphore, #tpu.memory_space<semaphore_mem>> -> memref<1x!tpu.dma_semaphore, #tpu.memory_space<semaphore_mem>>
    %16 = tpu.memref_squeeze %15 : memref<1x!tpu.dma_semaphore, #tpu.memory_space<semaphore_mem>> -> memref<!tpu.dma_semaphore, #tpu.memory_space<semaphore_mem>>
    tpu.enqueue_dma source(%12 : memref<1x3x32x128xf32, #tpu.memory_space<any>>) target(%14 : memref<1x3x32x128xf32, #tpu.memory_space<vmem>>) target_semaphore(%16 : memref<!tpu.dma_semaphore, #tpu.memory_space<semaphore_mem>>)
    %c1_i32_13 = arith.constant 1 : i32
    %17 = arith.muli %arg0, %c1_i32_13 : i32
    %c16_i32 = arith.constant 16 : i32
    %18 = arith.muli %arg1, %c16_i32 : i32
    %19 = tpu.assume_multiple %18, 8 : i32
    %c0_i32_14 = arith.constant 0 : i32
    %c0_i32_15 = arith.constant 0 : i32
    %20 = tpu.memref_slice %arg2[%17, %c0_i32_14, %19, %c0_i32_15] : memref<2x3x32x128xf32, #tpu.memory_space<any>> -> memref<1x3x32x128xf32, #tpu.memory_space<any>>
    %c0_i32_16 = arith.constant 0 : i32
    %c0_i32_17 = arith.constant 0 : i32
    %c0_i32_18 = arith.constant 0 : i32
    %c0_i32_19 = arith.constant 0 : i32
    %21 = tpu.memref_slice %arg4[%9, %c0_i32_16, %c0_i32_17, %c0_i32_18, %c0_i32_19] : memref<2x1x3x32x128xf32, #tpu.memory_space<vmem>> -> memref<1x1x3x32x128xf32, #tpu.memory_space<vmem>>
    %22 = tpu.memref_squeeze %21 : memref<1x1x3x32x128xf32, #tpu.memory_space<vmem>> -> memref<1x3x32x128xf32, #tpu.memory_space<vmem>>
    %23 = tpu.memref_slice %arg5[%9] : memref<2x!tpu.dma_semaphore, #tpu.memory_space<semaphore_mem>> -> memref<1x!tpu.dma_semaphore, #tpu.memory_space<semaphore_mem>>
    %24 = tpu.memref_squeeze %23 : memref<1x!tpu.dma_semaphore, #tpu.memory_space<semaphore_mem>> -> memref<!tpu.dma_semaphore, #tpu.memory_space<semaphore_mem>>
    tpu.wait_dma2 semaphore(%24 : memref<!tpu.dma_semaphore, #tpu.memory_space<semaphore_mem>>) src(%20 : memref<1x3x32x128xf32, #tpu.memory_space<any>>) dst(%22 : memref<1x3x32x128xf32, #tpu.memory_space<vmem>>)
    %25 = tpu.iota {dimensions = array<i32: 0>} : vector<32x1xi32>
    %c16_i32_20 = arith.constant 16 : i32
    %26 = arith.muli %arg1, %c16_i32_20 : i32
    %c8_i32 = arith.constant 8 : i32
    %27 = arith.subi %26, %c8_i32 : i32
    %28 = vector.broadcast %27 : i32 to vector<32x1xi32>
    %29 = arith.addi %25, %28 : vector<32x1xi32>
    %30 = tpu.iota {dimensions = array<i32: 1>} : vector<1x128xi32>
    %c0_i32_21 = arith.constant 0 : i32
    %31 = vector.broadcast %c0_i32_21 : i32 to vector<32x1xi32>
    %32 = arith.cmpi sge, %29, %31 : vector<32x1xi32>
    %c16_i32_22 = arith.constant 16 : i32
    %33 = vector.broadcast %c16_i32_22 : i32 to vector<32x1xi32>
    %34 = arith.cmpi slt, %29, %33 : vector<32x1xi32>
    %35 = arith.andi %32, %34 : vector<32x1xi1>
    %c16_i32_23 = arith.constant 16 : i32
    %36 = vector.broadcast %c16_i32_23 : i32 to vector<1x128xi32>
    %37 = arith.cmpi slt, %30, %36 : vector<1x128xi32>
    %38 = vector.broadcast %35 : vector<32x1xi1> to vector<32x128xi1>
    %39 = vector.broadcast %37 : vector<1x128xi1> to vector<32x128xi1>
    %40 = arith.andi %38, %39 : vector<32x128xi1>
    %41 = arith.index_cast %9 : i32 to index
    %c0 = arith.constant 0 : index
    %c0_24 = arith.constant 0 : index
    %c0_25 = arith.constant 0 : index
    %c0_26 = arith.constant 0 : index
    %42 = vector.load %arg4[%41, %c0, %c0_24, %c0_25, %c0_26] : memref<2x1x3x32x128xf32, #tpu.memory_space<vmem>>, vector<1x1x1x32x128xf32>
    %43 = vector.shape_cast %42 : vector<1x1x1x32x128xf32> to vector<32x128xf32>
    %c1_i32_27 = arith.constant 1 : i32
    %44 = tpu.dynamic_rotate %43 by %c1_i32_27 dim 1 : vector<32x128xf32>, i32 -> vector<32x128xf32>
    %c127_i32 = arith.constant 127 : i32
    %45 = tpu.dynamic_rotate %43 by %c127_i32 dim 1 : vector<32x128xf32>, i32 -> vector<32x128xf32>
    %46 = arith.addf %44, %45 : vector<32x128xf32>
    %cst = arith.constant 0.606530666 : f32
    %47 = vector.broadcast %cst : f32 to vector<32x128xf32>
    %48 = arith.mulf %47, %46 : vector<32x128xf32>
    %49 = arith.addf %43, %48 : vector<32x128xf32>
    %c2_i32_28 = arith.constant 2 : i32
    %50 = tpu.dynamic_rotate %43 by %c2_i32_28 dim 1 : vector<32x128xf32>, i32 -> vector<32x128xf32>
    %c126_i32 = arith.constant 126 : i32
    %51 = tpu.dynamic_rotate %43 by %c126_i32 dim 1 : vector<32x128xf32>, i32 -> vector<32x128xf32>
    %52 = arith.addf %50, %51 : vector<32x128xf32>
    %cst_29 = arith.constant 0.135335281 : f32
    %53 = vector.broadcast %cst_29 : f32 to vector<32x128xf32>
    %54 = arith.mulf %53, %52 : vector<32x128xf32>
    %55 = arith.addf %49, %54 : vector<32x128xf32>
    %c1_i32_30 = arith.constant 1 : i32
    %56 = tpu.dynamic_rotate %55 by %c1_i32_30 dim 0 : vector<32x128xf32>, i32 -> vector<32x128xf32>
    %c31_i32 = arith.constant 31 : i32
    %57 = tpu.dynamic_rotate %55 by %c31_i32 dim 0 : vector<32x128xf32>, i32 -> vector<32x128xf32>
    %58 = arith.addf %56, %57 : vector<32x128xf32>
    %cst_31 = arith.constant 0.606530666 : f32
    %59 = vector.broadcast %cst_31 : f32 to vector<32x128xf32>
    %60 = arith.mulf %59, %58 : vector<32x128xf32>
    %61 = arith.addf %55, %60 : vector<32x128xf32>
    %c2_i32_32 = arith.constant 2 : i32
    %62 = tpu.dynamic_rotate %55 by %c2_i32_32 dim 0 : vector<32x128xf32>, i32 -> vector<32x128xf32>
    %c30_i32 = arith.constant 30 : i32
    %63 = tpu.dynamic_rotate %55 by %c30_i32 dim 0 : vector<32x128xf32>, i32 -> vector<32x128xf32>
    %64 = arith.addf %62, %63 : vector<32x128xf32>
    %cst_33 = arith.constant 0.135335281 : f32
    %65 = vector.broadcast %cst_33 : f32 to vector<32x128xf32>
    %66 = arith.mulf %65, %64 : vector<32x128xf32>
    %67 = arith.addf %61, %66 : vector<32x128xf32>
    %cst_34 = arith.constant 0.000000e+00 : f32
    %68 = vector.broadcast %cst_34 : f32 to vector<32x128xf32>
    %69 = arith.select %40, %67, %68 : vector<32x128xi1>, vector<32x128xf32>
    %c1_i32_35 = arith.constant 1 : i32
    %70 = tpu.dynamic_rotate %69 by %c1_i32_35 dim 1 : vector<32x128xf32>, i32 -> vector<32x128xf32>
    %c127_i32_36 = arith.constant 127 : i32
    %71 = tpu.dynamic_rotate %69 by %c127_i32_36 dim 1 : vector<32x128xf32>, i32 -> vector<32x128xf32>
    %72 = arith.subf %70, %71 : vector<32x128xf32>
    %c1_i32_37 = arith.constant 1 : i32
    %73 = tpu.dynamic_rotate %69 by %c1_i32_37 dim 0 : vector<32x128xf32>, i32 -> vector<32x128xf32>
    %c31_i32_38 = arith.constant 31 : i32
    %74 = tpu.dynamic_rotate %69 by %c31_i32_38 dim 0 : vector<32x128xf32>, i32 -> vector<32x128xf32>
    %75 = arith.subf %73, %74 : vector<32x128xf32>
    %c1_i32_39 = arith.constant 1 : i32
    %76 = tpu.dynamic_rotate %72 by %c1_i32_39 dim 0 : vector<32x128xf32>, i32 -> vector<32x128xf32>
    %77 = arith.addf %72, %72 : vector<32x128xf32>
    %78 = arith.addf %76, %77 : vector<32x128xf32>
    %c31_i32_40 = arith.constant 31 : i32
    %79 = tpu.dynamic_rotate %72 by %c31_i32_40 dim 0 : vector<32x128xf32>, i32 -> vector<32x128xf32>
    %80 = arith.addf %78, %79 : vector<32x128xf32>
    %c1_i32_41 = arith.constant 1 : i32
    %81 = tpu.dynamic_rotate %75 by %c1_i32_41 dim 1 : vector<32x128xf32>, i32 -> vector<32x128xf32>
    %82 = arith.addf %75, %75 : vector<32x128xf32>
    %83 = arith.addf %81, %82 : vector<32x128xf32>
    %c127_i32_42 = arith.constant 127 : i32
    %84 = tpu.dynamic_rotate %75 by %c127_i32_42 dim 1 : vector<32x128xf32>, i32 -> vector<32x128xf32>
    %85 = arith.addf %83, %84 : vector<32x128xf32>
    %86 = arith.mulf %80, %80 : vector<32x128xf32>
    %87 = arith.mulf %85, %85 : vector<32x128xf32>
    %88 = arith.addf %86, %87 : vector<32x128xf32>
    %89 = math.sqrt %88 : vector<32x128xf32>
    %90 = arith.index_cast %9 : i32 to index
    %c0_43 = arith.constant 0 : index
    %c1 = arith.constant 1 : index
    %c0_44 = arith.constant 0 : index
    %c0_45 = arith.constant 0 : index
    %91 = vector.load %arg4[%90, %c0_43, %c1, %c0_44, %c0_45] : memref<2x1x3x32x128xf32, #tpu.memory_space<vmem>>, vector<1x1x1x32x128xf32>
    %92 = vector.shape_cast %91 : vector<1x1x1x32x128xf32> to vector<32x128xf32>
    %c1_i32_46 = arith.constant 1 : i32
    %93 = tpu.dynamic_rotate %92 by %c1_i32_46 dim 1 : vector<32x128xf32>, i32 -> vector<32x128xf32>
    %c127_i32_47 = arith.constant 127 : i32
    %94 = tpu.dynamic_rotate %92 by %c127_i32_47 dim 1 : vector<32x128xf32>, i32 -> vector<32x128xf32>
    %95 = arith.addf %93, %94 : vector<32x128xf32>
    %cst_48 = arith.constant 0.606530666 : f32
    %96 = vector.broadcast %cst_48 : f32 to vector<32x128xf32>
    %97 = arith.mulf %96, %95 : vector<32x128xf32>
    %98 = arith.addf %92, %97 : vector<32x128xf32>
    %c2_i32_49 = arith.constant 2 : i32
    %99 = tpu.dynamic_rotate %92 by %c2_i32_49 dim 1 : vector<32x128xf32>, i32 -> vector<32x128xf32>
    %c126_i32_50 = arith.constant 126 : i32
    %100 = tpu.dynamic_rotate %92 by %c126_i32_50 dim 1 : vector<32x128xf32>, i32 -> vector<32x128xf32>
    %101 = arith.addf %99, %100 : vector<32x128xf32>
    %cst_51 = arith.constant 0.135335281 : f32
    %102 = vector.broadcast %cst_51 : f32 to vector<32x128xf32>
    %103 = arith.mulf %102, %101 : vector<32x128xf32>
    %104 = arith.addf %98, %103 : vector<32x128xf32>
    %c1_i32_52 = arith.constant 1 : i32
    %105 = tpu.dynamic_rotate %104 by %c1_i32_52 dim 0 : vector<32x128xf32>, i32 -> vector<32x128xf32>
    %c31_i32_53 = arith.constant 31 : i32
    %106 = tpu.dynamic_rotate %104 by %c31_i32_53 dim 0 : vector<32x128xf32>, i32 -> vector<32x128xf32>
    %107 = arith.addf %105, %106 : vector<32x128xf32>
    %cst_54 = arith.constant 0.606530666 : f32
    %108 = vector.broadcast %cst_54 : f32 to vector<32x128xf32>
    %109 = arith.mulf %108, %107 : vector<32x128xf32>
    %110 = arith.addf %104, %109 : vector<32x128xf32>
    %c2_i32_55 = arith.constant 2 : i32
    %111 = tpu.dynamic_rotate %104 by %c2_i32_55 dim 0 : vector<32x128xf32>, i32 -> vector<32x128xf32>
    %c30_i32_56 = arith.constant 30 : i32
    %112 = tpu.dynamic_rotate %104 by %c30_i32_56 dim 0 : vector<32x128xf32>, i32 -> vector<32x128xf32>
    %113 = arith.addf %111, %112 : vector<32x128xf32>
    %cst_57 = arith.constant 0.135335281 : f32
    %114 = vector.broadcast %cst_57 : f32 to vector<32x128xf32>
    %115 = arith.mulf %114, %113 : vector<32x128xf32>
    %116 = arith.addf %110, %115 : vector<32x128xf32>
    %cst_58 = arith.constant 0.000000e+00 : f32
    %117 = vector.broadcast %cst_58 : f32 to vector<32x128xf32>
    %118 = arith.select %40, %116, %117 : vector<32x128xi1>, vector<32x128xf32>
    %c1_i32_59 = arith.constant 1 : i32
    %119 = tpu.dynamic_rotate %118 by %c1_i32_59 dim 1 : vector<32x128xf32>, i32 -> vector<32x128xf32>
    %c127_i32_60 = arith.constant 127 : i32
    %120 = tpu.dynamic_rotate %118 by %c127_i32_60 dim 1 : vector<32x128xf32>, i32 -> vector<32x128xf32>
    %121 = arith.subf %119, %120 : vector<32x128xf32>
    %c1_i32_61 = arith.constant 1 : i32
    %122 = tpu.dynamic_rotate %118 by %c1_i32_61 dim 0 : vector<32x128xf32>, i32 -> vector<32x128xf32>
    %c31_i32_62 = arith.constant 31 : i32
    %123 = tpu.dynamic_rotate %118 by %c31_i32_62 dim 0 : vector<32x128xf32>, i32 -> vector<32x128xf32>
    %124 = arith.subf %122, %123 : vector<32x128xf32>
    %c1_i32_63 = arith.constant 1 : i32
    %125 = tpu.dynamic_rotate %121 by %c1_i32_63 dim 0 : vector<32x128xf32>, i32 -> vector<32x128xf32>
    %126 = arith.addf %121, %121 : vector<32x128xf32>
    %127 = arith.addf %125, %126 : vector<32x128xf32>
    %c31_i32_64 = arith.constant 31 : i32
    %128 = tpu.dynamic_rotate %121 by %c31_i32_64 dim 0 : vector<32x128xf32>, i32 -> vector<32x128xf32>
    %129 = arith.addf %127, %128 : vector<32x128xf32>
    %c1_i32_65 = arith.constant 1 : i32
    %130 = tpu.dynamic_rotate %124 by %c1_i32_65 dim 1 : vector<32x128xf32>, i32 -> vector<32x128xf32>
    %131 = arith.addf %124, %124 : vector<32x128xf32>
    %132 = arith.addf %130, %131 : vector<32x128xf32>
    %c127_i32_66 = arith.constant 127 : i32
    %133 = tpu.dynamic_rotate %124 by %c127_i32_66 dim 1 : vector<32x128xf32>, i32 -> vector<32x128xf32>
    %134 = arith.addf %132, %133 : vector<32x128xf32>
    %135 = arith.mulf %129, %129 : vector<32x128xf32>
    %136 = arith.mulf %134, %134 : vector<32x128xf32>
    %137 = arith.addf %135, %136 : vector<32x128xf32>
    %138 = math.sqrt %137 : vector<32x128xf32>
    %139 = arith.addf %89, %138 : vector<32x128xf32>
    %140 = arith.addf %80, %129 : vector<32x128xf32>
    %141 = arith.addf %85, %134 : vector<32x128xf32>
    %142 = arith.index_cast %9 : i32 to index
    %c0_67 = arith.constant 0 : index
    %c2 = arith.constant 2 : index
    %c0_68 = arith.constant 0 : index
    %c0_69 = arith.constant 0 : index
    %143 = vector.load %arg4[%142, %c0_67, %c2, %c0_68, %c0_69] : memref<2x1x3x32x128xf32, #tpu.memory_space<vmem>>, vector<1x1x1x32x128xf32>
    %144 = vector.shape_cast %143 : vector<1x1x1x32x128xf32> to vector<32x128xf32>
    %c1_i32_70 = arith.constant 1 : i32
    %145 = tpu.dynamic_rotate %144 by %c1_i32_70 dim 1 : vector<32x128xf32>, i32 -> vector<32x128xf32>
    %c127_i32_71 = arith.constant 127 : i32
    %146 = tpu.dynamic_rotate %144 by %c127_i32_71 dim 1 : vector<32x128xf32>, i32 -> vector<32x128xf32>
    %147 = arith.addf %145, %146 : vector<32x128xf32>
    %cst_72 = arith.constant 0.606530666 : f32
    %148 = vector.broadcast %cst_72 : f32 to vector<32x128xf32>
    %149 = arith.mulf %148, %147 : vector<32x128xf32>
    %150 = arith.addf %144, %149 : vector<32x128xf32>
    %c2_i32_73 = arith.constant 2 : i32
    %151 = tpu.dynamic_rotate %144 by %c2_i32_73 dim 1 : vector<32x128xf32>, i32 -> vector<32x128xf32>
    %c126_i32_74 = arith.constant 126 : i32
    %152 = tpu.dynamic_rotate %144 by %c126_i32_74 dim 1 : vector<32x128xf32>, i32 -> vector<32x128xf32>
    %153 = arith.addf %151, %152 : vector<32x128xf32>
    %cst_75 = arith.constant 0.135335281 : f32
    %154 = vector.broadcast %cst_75 : f32 to vector<32x128xf32>
    %155 = arith.mulf %154, %153 : vector<32x128xf32>
    %156 = arith.addf %150, %155 : vector<32x128xf32>
    %c1_i32_76 = arith.constant 1 : i32
    %157 = tpu.dynamic_rotate %156 by %c1_i32_76 dim 0 : vector<32x128xf32>, i32 -> vector<32x128xf32>
    %c31_i32_77 = arith.constant 31 : i32
    %158 = tpu.dynamic_rotate %156 by %c31_i32_77 dim 0 : vector<32x128xf32>, i32 -> vector<32x128xf32>
    %159 = arith.addf %157, %158 : vector<32x128xf32>
    %cst_78 = arith.constant 0.606530666 : f32
    %160 = vector.broadcast %cst_78 : f32 to vector<32x128xf32>
    %161 = arith.mulf %160, %159 : vector<32x128xf32>
    %162 = arith.addf %156, %161 : vector<32x128xf32>
    %c2_i32_79 = arith.constant 2 : i32
    %163 = tpu.dynamic_rotate %156 by %c2_i32_79 dim 0 : vector<32x128xf32>, i32 -> vector<32x128xf32>
    %c30_i32_80 = arith.constant 30 : i32
    %164 = tpu.dynamic_rotate %156 by %c30_i32_80 dim 0 : vector<32x128xf32>, i32 -> vector<32x128xf32>
    %165 = arith.addf %163, %164 : vector<32x128xf32>
    %cst_81 = arith.constant 0.135335281 : f32
    %166 = vector.broadcast %cst_81 : f32 to vector<32x128xf32>
    %167 = arith.mulf %166, %165 : vector<32x128xf32>
    %168 = arith.addf %162, %167 : vector<32x128xf32>
    %cst_82 = arith.constant 0.000000e+00 : f32
    %169 = vector.broadcast %cst_82 : f32 to vector<32x128xf32>
    %170 = arith.select %40, %168, %169 : vector<32x128xi1>, vector<32x128xf32>
    %c1_i32_83 = arith.constant 1 : i32
    %171 = tpu.dynamic_rotate %170 by %c1_i32_83 dim 1 : vector<32x128xf32>, i32 -> vector<32x128xf32>
    %c127_i32_84 = arith.constant 127 : i32
    %172 = tpu.dynamic_rotate %170 by %c127_i32_84 dim 1 : vector<32x128xf32>, i32 -> vector<32x128xf32>
    %173 = arith.subf %171, %172 : vector<32x128xf32>
    %c1_i32_85 = arith.constant 1 : i32
    %174 = tpu.dynamic_rotate %170 by %c1_i32_85 dim 0 : vector<32x128xf32>, i32 -> vector<32x128xf32>
    %c31_i32_86 = arith.constant 31 : i32
    %175 = tpu.dynamic_rotate %170 by %c31_i32_86 dim 0 : vector<32x128xf32>, i32 -> vector<32x128xf32>
    %176 = arith.subf %174, %175 : vector<32x128xf32>
    %c1_i32_87 = arith.constant 1 : i32
    %177 = tpu.dynamic_rotate %173 by %c1_i32_87 dim 0 : vector<32x128xf32>, i32 -> vector<32x128xf32>
    %178 = arith.addf %173, %173 : vector<32x128xf32>
    %179 = arith.addf %177, %178 : vector<32x128xf32>
    %c31_i32_88 = arith.constant 31 : i32
    %180 = tpu.dynamic_rotate %173 by %c31_i32_88 dim 0 : vector<32x128xf32>, i32 -> vector<32x128xf32>
    %181 = arith.addf %179, %180 : vector<32x128xf32>
    %c1_i32_89 = arith.constant 1 : i32
    %182 = tpu.dynamic_rotate %176 by %c1_i32_89 dim 1 : vector<32x128xf32>, i32 -> vector<32x128xf32>
    %183 = arith.addf %176, %176 : vector<32x128xf32>
    %184 = arith.addf %182, %183 : vector<32x128xf32>
    %c127_i32_90 = arith.constant 127 : i32
    %185 = tpu.dynamic_rotate %176 by %c127_i32_90 dim 1 : vector<32x128xf32>, i32 -> vector<32x128xf32>
    %186 = arith.addf %184, %185 : vector<32x128xf32>
    %187 = arith.mulf %181, %181 : vector<32x128xf32>
    %188 = arith.mulf %186, %186 : vector<32x128xf32>
    %189 = arith.addf %187, %188 : vector<32x128xf32>
    %190 = math.sqrt %189 : vector<32x128xf32>
    %191 = arith.addf %139, %190 : vector<32x128xf32>
    %192 = arith.addf %140, %181 : vector<32x128xf32>
    %193 = arith.addf %141, %186 : vector<32x128xf32>
    %cst_91 = arith.constant 0.000000e+00 : f32
    %194 = vector.broadcast %cst_91 : f32 to vector<32x128xf32>
    %195 = arith.select %40, %191, %194 : vector<32x128xi1>, vector<32x128xf32>
    %c127_i32_92 = arith.constant 127 : i32
    %196 = tpu.dynamic_rotate %195 by %c127_i32_92 dim 1 : vector<32x128xf32>, i32 -> vector<32x128xf32>
    %c1_i32_93 = arith.constant 1 : i32
    %197 = tpu.dynamic_rotate %195 by %c1_i32_93 dim 1 : vector<32x128xf32>, i32 -> vector<32x128xf32>
    %c31_i32_94 = arith.constant 31 : i32
    %198 = tpu.dynamic_rotate %195 by %c31_i32_94 dim 0 : vector<32x128xf32>, i32 -> vector<32x128xf32>
    %c1_i32_95 = arith.constant 1 : i32
    %199 = tpu.dynamic_rotate %195 by %c1_i32_95 dim 0 : vector<32x128xf32>, i32 -> vector<32x128xf32>
    %c31_i32_96 = arith.constant 31 : i32
    %200 = tpu.dynamic_rotate %196 by %c31_i32_96 dim 0 : vector<32x128xf32>, i32 -> vector<32x128xf32>
    %c1_i32_97 = arith.constant 1 : i32
    %201 = tpu.dynamic_rotate %196 by %c1_i32_97 dim 0 : vector<32x128xf32>, i32 -> vector<32x128xf32>
    %c31_i32_98 = arith.constant 31 : i32
    %202 = tpu.dynamic_rotate %197 by %c31_i32_98 dim 0 : vector<32x128xf32>, i32 -> vector<32x128xf32>
    %c1_i32_99 = arith.constant 1 : i32
    %203 = tpu.dynamic_rotate %197 by %c1_i32_99 dim 0 : vector<32x128xf32>, i32 -> vector<32x128xf32>
    %204 = arith.maximumf %196, %197 : vector<32x128xf32>
    %205 = arith.maximumf %198, %199 : vector<32x128xf32>
    %206 = arith.maximumf %200, %203 : vector<32x128xf32>
    %207 = arith.maximumf %202, %201 : vector<32x128xf32>
    %208 = math.absf %192 : vector<32x128xf32>
    %209 = math.absf %193 : vector<32x128xf32>
    %cst_100 = arith.constant 0.414213568 : f32
    %210 = vector.broadcast %cst_100 : f32 to vector<32x128xf32>
    %211 = arith.mulf %210, %208 : vector<32x128xf32>
    %212 = arith.cmpf ole, %209, %211 : vector<32x128xf32>
    %cst_101 = arith.constant 0.414213568 : f32
    %213 = vector.broadcast %cst_101 : f32 to vector<32x128xf32>
    %214 = arith.mulf %213, %209 : vector<32x128xf32>
    %215 = arith.cmpf olt, %208, %214 : vector<32x128xf32>
    %cst_102 = arith.constant 0.000000e+00 : f32
    %216 = vector.broadcast %cst_102 : f32 to vector<32x128xf32>
    %217 = arith.cmpf ogt, %193, %216 : vector<32x128xf32>
    %cst_103 = arith.constant 0.000000e+00 : f32
    %218 = vector.broadcast %cst_103 : f32 to vector<32x128xf32>
    %219 = arith.cmpf ogt, %192, %218 : vector<32x128xf32>
    %220 = arith.xori %217, %219 : vector<32x128xi1>
    %cst_104 = arith.constant dense<true> : vector<32x128xi1>
    %221 = arith.xori %220, %cst_104 : vector<32x128xi1>
    %222 = arith.select %221, %206, %207 : vector<32x128xi1>, vector<32x128xf32>
    %223 = arith.select %215, %205, %222 : vector<32x128xi1>, vector<32x128xf32>
    %224 = arith.select %212, %204, %223 : vector<32x128xi1>, vector<32x128xf32>
    %225 = arith.cmpf ogt, %195, %224 : vector<32x128xf32>
    %cst_105 = arith.constant 1.000000e+01 : f32
    %226 = vector.broadcast %cst_105 : f32 to vector<32x128xf32>
    %227 = arith.cmpf oge, %195, %226 : vector<32x128xf32>
    %228 = arith.andi %225, %227 : vector<32x128xi1>
    %cst_106 = arith.constant 0.000000e+00 : f32
    %229 = vector.broadcast %cst_106 : f32 to vector<32x128xf32>
    %230 = arith.select %228, %195, %229 : vector<32x128xi1>, vector<32x128xf32>
    %231 = vector.extract_strided_slice %230 {offsets = [8, 0], sizes = [16, 128], strides = [1, 1]} : vector<32x128xf32> to vector<16x128xf32>
    %c0_107 = arith.constant 0 : index
    %c0_108 = arith.constant 0 : index
    %c0_109 = arith.constant 0 : index
    %c0_110 = arith.constant 0 : index
    %232 = vector.load %arg3[%c0_107, %c0_108, %c0_109, %c0_110] : memref<1x1x16x128xf32, #tpu.memory_space<vmem>>, vector<1x1x16x128xf32>
    %233 = vector.shape_cast %232 : vector<1x1x16x128xf32> to vector<16x128xf32>
    %234 = vector.shape_cast %231 : vector<16x128xf32> to vector<1x1x16x128xf32>
    tpu.vector_store %arg3[%c0_107, %c0_108, %c0_109, %c0_110], %234 {strides = array<i32>} : memref<1x1x16x128xf32, #tpu.memory_space<vmem>>, vector<1x1x16x128xf32>,
    return
  }
  func.func @transform_1(%arg0: i32, %arg1: i32) -> (i32, i32, i32, i32) {
    %c0_i32 = arith.constant 0 : i32
    %c0_i32_0 = arith.constant 0 : i32
    %c0_i32_1 = arith.constant 0 : i32
    return %arg0, %c0_i32, %arg1, %c0_i32_0 : i32, i32, i32, i32
  }
}

</mosaic_0001>

<llo_original>
// kernel: tpu_custom_call.1
$region0: #{tpu_custom_call.1}
  #allocation0 [shape = 'u32[]', space=smem, size = 0x4, offset = 0x4, fixed_abs, tag = 'smem constant byte address 0x4 - core index']
  #allocation1 [shape = 'u32[144,128]{1,0:T(1,128)}', space=vmem, size = 0x12000, scoped, tag = 'internal scratch']
  #allocation2 [shape = 'f32[2,1,3,32,128]{4,3,2,1,0:T(8,128)}', space=vmem, size = 0x18000, scoped, tag = 'scratch operand']
  #allocation3 [shape = 's32[2]{0}', space=sflag, size = 0x8, scoped, tag = 'scratch operand']
  #allocation6 [shape = 's32[]', space=sflag, size = 0x4, offset = 0, fixed_abs, tag = 'sflag constant byte address 0x0 - dummy sync flag']
  #allocation7 [shape = 's32[]', space=sflag, size = 0x4, offset = 0, fixed_abs, tag = 'sflag constant byte address 0x0 - dummy sync flag']
  #allocation8 [shape = 'u32[]', space=smem, size = 0x4, offset = 0x44, fixed_abs, tag = 'smem constant byte address 0x44 - assertion arg 0']
  #allocation9 [shape = 'u32[]', space=smem, size = 0x4, offset = 0x48, fixed_abs, tag = 'smem constant byte address 0x48 - assertion arg 1']
  %s0 = inlined_call_operand.hbm [shape: f32[2,3,32,128], index: 0, kind: input, shape index: {}]
  %s1 = inlined_call_operand.hbm [shape: f32[2,1,16,128], index: 1, kind: output, shape index: {}]
  %s2 = sld [smem:[#allocation0]]
  $region29: #{tpu_custom_call.1} parent=0
    _
  %s4 = ssub.s32 1, %s2
  %s5 = scalar_select 0, %s4, %s2
  $region1: #{tpu_custom_call.1} parent=0
    #allocation4 [shape = 'u8[16384]{0}', space=vmem, size = 0x4000, scoped, tag = 'output window, operand 0']
    #allocation5 [shape = 's32[2]{0}', space=sflag, size = 0x8, scoped, tag = 'scoped memory for tpu_custom_call.1']
    %6 = vsyncpa [#allocation5], 0
    %s7 = scalar_lea.sflag [#allocation5], 1
    %8 = vsyncpa %s7, 0
    loop: start=0, step=1, limit=3
    $region2: #{tpu_custom_call.1} parent=1 // loop_pre_header
      _
    $region3: #{tpu_custom_call.1} parent=1 // loop_header
      %s10 = sphi 0, %s14
      %p11 = scmp.ge.s32.totalorder %s10, 3
      %s16 = sphi 0, %s26
      %s17 = sphi 0, %s22
      %s18 = sphi 0, %s16
      %s19 = sphi 0, %s17
      %s31 = sphi 0, %s33
      %s34 = sphi 0, %s31
      %s44 = sphi 0, %s34
    $region4: #{tpu_custom_call.1} parent=1 // loop_header_branch
      %13 = sbr.rel (%p11) target = $region8
    $region5: #{tpu_custom_call.1} parent=1 // loop_body
      %s15 = ssub.s32 %s10, 1
      %s20 = sadd.s32 1, %s17
      %p21 = scmp.ge.s32.totalorder %s20, 1
      %s22 = scalar_select %p21, 0, %s20
      %s23 = sadd.s32 1, %s16
      %s24 = scalar_select %p21, %s23, %s16
      %p25 = scmp.ge.s32.totalorder %s24, 2
      %s26 = scalar_select %p25, 0, %s24
      %s27 = ssub.s32 %s16, %s26
      %s28 = ssub.s32 %s17, %s22
      %s29 = sor.u32 %s27, %s28
      %p30 = scmp.eq.s32.totalorder %s29, 0
      %s32 = sadd.s32 %s31, 1
      %s33 = scalar_select %p30, %s31, %s32
      %p35 = pneg %p30
      %p36 = scmp.eq.s32.totalorder %s10, 1
      %p37 = por %p35, %p36
      %p38 = scmp.ne.s32.totalorder %s31, %s34
      %p39 = scmp.eq.s32.totalorder %s10, 0
      %p40 = por %p38, %p39
      %p41 = scmp.ne.s32.totalorder %s31, %s34
      %p42 = scmp.eq.s32.totalorder %s15, 1
      %p43 = por %p41, %p42
      %p45 = scmp.ne.s32.totalorder %s34, %s44
      %p46 = scmp.eq.s32.totalorder %s15, 0
      %p47 = por %p45, %p46
      %p48 = scmp.lt.s32.totalorder %s10, 2
      // Predicated region
      $region9: #{tpu_custom_call.1} parent=5 // pred_check
        %p49 = pneg %p48
      $region10: #{tpu_custom_call.1} parent=5 // pred_check_branch
        %51 = sbr.rel (%p49) target = $region12
      $region11: #{tpu_custom_call.1} parent=5 // pred_region
        %p52 = pneg %p40
        %p53 = pneg %p37
        %s54 = sand.u32 %s31, 1
        %s55 = scalar_lea.sflag [#allocation5], %s54
        %s56 = sand.u32 %s31, 1
        %s57 = smul.addr %s56, 16
        %s58 = scalar_lea.vmem [#allocation4], %s57
        %s59 = smul.u32 2, %s17
        %p60 = scmp.lt.s32.totalorder %s17, 0
        %s61 = ssub.s32 0, %s17
        %s62 = scalar_select %p60, %s61, %s17
        %s63 = sand.u32 %s62, 1
        %s64 = ssub.s32 0, %s63
        %s65 = scalar_select %p60, %s64, %s63
        %p66 = scmp.ne.s32.totalorder %s65, 0
        %p67 = scmp.lt.s32.totalorder %s65, 0
        %p68 = pnand %p67, %p66
        %p69 = pneg %p68
        %s70 = sadd.s32 %s65, 2
        %s71 = scalar_select %p69, %s70, %s65
        %s72 = smul.u32 %s16, 96
        %s73 = sadd.s32 0, %s72
        %s74 = smul.addr %s73, 16
        %s75 = scalar_lea.hbm %s0, %s74
        // Predicated region
        $region13: #{tpu_custom_call.1} parent=11 // pred_check
          _
        $region14: #{tpu_custom_call.1} parent=11 // pred_check_branch
          %77 = sbr.rel target = $region16
        $region15: #{tpu_custom_call.1} parent=11 // pred_region
          %78 = sst [smem:[#allocation8]] [#allocation7]
          %79 = sst [smem:[#allocation9]] [#allocation6]
        $region16: #{tpu_custom_call.1} parent=11 // pred_fallthru
          _
        %81 = shalt.err (0)
        %s83 = sshll.u32 [#allocation2], 4
        %s84 = int_to_ptr.vmem [resolvable:$true] %s83
        %86 = dma.hbm_to_vmem [thread:$0]  %s75, 1536, %s84, [#allocation3]
        %s87 = smul.u32 %s17, 16
        %s88 = scalar_lea.sflag [#allocation3], %s71
        %s89 = smul.u32 1, 3
        %s90 = smul.u32 %s89, 32
        %s91 = smul.u32 %s90, 1
        %s92 = sshll.u32 %s91, 4
        %93 = dma.done %s88, %s92
        %v94 = vlaneseq
        %v95 = vshrl.u32 %v94, 7
        %v96 = vadd.s32 %v95, 8
        %v97 = vadd.s32 %v95, 16
        %v98 = vadd.s32 %v95, 24
        %s99 = ssub.s32 %s87, 8
        %v100 = vstv %s99
        %v101 = vadd.s32 %v95, %v100
        %v102 = vadd.s32 %v96, %v100
        %v103 = vadd.s32 %v97, %v100
        %v104 = vadd.s32 %v98, %v100
        %v105 = vlaneseq
        %v106 = vand.u32 %v105, 127
        %vm107 = vcmp.ge.s32.totalorder %v101, 0
        %vm108 = vcmp.ge.s32.totalorder %v102, 0
        %vm109 = vcmp.ge.s32.totalorder %v103, 0
        %vm110 = vcmp.ge.s32.totalorder %v104, 0
        %vm111 = vcmp.lt.s32.totalorder %v101, 16
        %vm112 = vcmp.lt.s32.totalorder %v102, 16
        %vm113 = vcmp.lt.s32.totalorder %v103, 16
        %vm114 = vcmp.lt.s32.totalorder %v104, 16
        %vm115 = vmand %vm107, %vm111
        %vm116 = vmand %vm108, %vm112
        %vm117 = vmand %vm109, %vm113
        %vm118 = vmand %vm110, %vm114
        %vm119 = vcmp.lt.s32.totalorder %v106, 16
        %v120 = vsel %vm115, 1, 0
        %v121 = vsel %vm116, 1, 0
        %v122 = vsel %vm117, 1, 0
        %v123 = vsel %vm118, 1, 0
        %vm124 = vcmp.eq.s32.totalorder %v120, 1
        %vm125 = vcmp.eq.s32.totalorder %v121, 1
        %vm126 = vcmp.eq.s32.totalorder %v122, 1
        %vm127 = vcmp.eq.s32.totalorder %v123, 1
        %v128 = vsel %vm119, 1, 0
        %vm129 = vcmp.eq.s32.totalorder %v128, 1
        %vm130 = vmand %vm124, %vm129
        %vm131 = vmand %vm125, %vm129
        %vm132 = vmand %vm126, %vm129
        %vm133 = vmand %vm127, %vm129
        %s134 = smul.u32 %s71, 96
        %s135 = scalar_lea.vmem [#allocation2], %s134
        %v136 = vld [vmem:[%s135] sm:$0xff]
        %v137 = vld [vmem:[%s135 + $0x8] sm:$0xff]
        %v138 = vld [vmem:[%s135 + $0x10] sm:$0xff]
        %v139 = vld [vmem:[%s135 + $0x18] sm:$0xff]
        %140 = vrot.lane.b32.xlu0 %v136, 1
        %v141 = vpop.permute.xlu0 %140
        %142 = vrot.lane.b32.xlu0 %v137, 1
        %v143 = vpop.permute.xlu0 %142
        %144 = vrot.lane.b32.xlu0 %v138, 1
        %v145 = vpop.permute.xlu0 %144
        %146 = vrot.lane.b32.xlu0 %v139, 1
        %v147 = vpop.permute.xlu0 %146
        %148 = vrot.lane.b32.xlu0 %v136, 127
        %v149 = vpop.permute.xlu0 %148
        %150 = vrot.lane.b32.xlu0 %v137, 127
        %v151 = vpop.permute.xlu0 %150
        %152 = vrot.lane.b32.xlu0 %v138, 127
        %v153 = vpop.permute.xlu0 %152
        %154 = vrot.lane.b32.xlu0 %v139, 127
        %v155 = vpop.permute.xlu0 %154
        %v156 = vadd.f32 %v141, %v149
        %v157 = vadd.f32 %v143, %v151
        %v158 = vadd.f32 %v145, %v153
        %v159 = vadd.f32 %v147, %v155
        %v160 = vmul.f32 %v156, 0.60653067
        %v161 = vmul.f32 %v157, 0.60653067
        %v162 = vmul.f32 %v158, 0.60653067
        %v163 = vmul.f32 %v159, 0.60653067
        %v164 = vadd.f32 %v136, %v160
        %v165 = vadd.f32 %v137, %v161
        %v166 = vadd.f32 %v138, %v162
        %v167 = vadd.f32 %v139, %v163
        %168 = vrot.lane.b32.xlu0 %v136, 2
        %v169 = vpop.permute.xlu0 %168
        %170 = vrot.lane.b32.xlu0 %v137, 2
        %v171 = vpop.permute.xlu0 %170
        %172 = vrot.lane.b32.xlu0 %v138, 2
        %v173 = vpop.permute.xlu0 %172
        %174 = vrot.lane.b32.xlu0 %v139, 2
        %v175 = vpop.permute.xlu0 %174
        %176 = vrot.lane.b32.xlu0 %v136, 126
        %v177 = vpop.permute.xlu0 %176
        %178 = vrot.lane.b32.xlu0 %v137, 126
        %v179 = vpop.permute.xlu0 %178
        %180 = vrot.lane.b32.xlu0 %v138, 126
        %v181 = vpop.permute.xlu0 %180
        %182 = vrot.lane.b32.xlu0 %v139, 126
        %v183 = vpop.permute.xlu0 %182
        %v184 = vadd.f32 %v169, %v177
        %v185 = vadd.f32 %v171, %v179
        %v186 = vadd.f32 %v173, %v181
        %v187 = vadd.f32 %v175, %v183
        %v188 = vmul.f32 %v184, 0.13533528
        %v189 = vmul.f32 %v185, 0.13533528
        %v190 = vmul.f32 %v186, 0.13533528
        %v191 = vmul.f32 %v187, 0.13533528
        %v192 = vadd.f32 %v164, %v188
        %v193 = vadd.f32 %v165, %v189
        %v194 = vadd.f32 %v166, %v190
        %v195 = vadd.f32 %v167, %v191
        %v196 = vrot.slane %v192, 7
        %v197 = vrot.slane %v193, 7
        %v198 = vrot.slane %v194, 7
        %v199 = vrot.slane %v195, 7
        %vm200 = vcmp.lt.s32.totalorder %v95, 1
        %v201 = vsel %vm200, %v198, %v199
        %v202 = vsel %vm200, %v197, %v198
        %v203 = vsel %vm200, %v196, %v197
        %v204 = vsel %vm200, %v199, %v196
        %v205 = vrot.slane %v192, 1
        %v206 = vrot.slane %v193, 1
        %v207 = vrot.slane %v194, 1
        %v208 = vrot.slane %v195, 1
        %vm209 = vcmp.lt.s32.totalorder %v95, 7
        %v210 = vsel %vm209, %v207, %v208
        %v211 = vsel %vm209, %v206, %v207
        %v212 = vsel %vm209, %v205, %v206
        %v213 = vsel %vm209, %v208, %v205
        %v214 = vadd.f32 %v204, %v212
        %v215 = vadd.f32 %v203, %v211
        %v216 = vadd.f32 %v202, %v210
        %v217 = vadd.f32 %v201, %v213
        %v218 = vmul.f32 %v214, 0.60653067
        %v219 = vmul.f32 %v215, 0.60653067
        %v220 = vmul.f32 %v216, 0.60653067
        %v221 = vmul.f32 %v217, 0.60653067
        %v222 = vadd.f32 %v192, %v218
        %v223 = vadd.f32 %v193, %v219
        %v224 = vadd.f32 %v194, %v220
        %v225 = vadd.f32 %v195, %v221
        %v226 = vrot.slane %v192, 6
        %v227 = vrot.slane %v193, 6
        %v228 = vrot.slane %v194, 6
        %v229 = vrot.slane %v195, 6
        %vm230 = vcmp.lt.s32.totalorder %v95, 2
        %v231 = vsel %vm230, %v228, %v229
        %v232 = vsel %vm230, %v227, %v228
        %v233 = vsel %vm230, %v226, %v227
        %v234 = vsel %vm230, %v229, %v226
        %v235 = vrot.slane %v192, 2
        %v236 = vrot.slane %v193, 2
        %v237 = vrot.slane %v194, 2
        %v238 = vrot.slane %v195, 2
        %vm239 = vcmp.lt.s32.totalorder %v95, 6
        %v240 = vsel %vm239, %v237, %v238
        %v241 = vsel %vm239, %v236, %v237
        %v242 = vsel %vm239, %v235, %v236
        %v243 = vsel %vm239, %v238, %v235
        %v244 = vadd.f32 %v234, %v242
        %v245 = vadd.f32 %v233, %v241
        %v246 = vadd.f32 %v232, %v240
        %v247 = vadd.f32 %v231, %v243
        %v248 = vmul.f32 %v244, 0.13533528
        %v249 = vmul.f32 %v245, 0.13533528
        %v250 = vmul.f32 %v246, 0.13533528
        %v251 = vmul.f32 %v247, 0.13533528
        %v252 = vadd.f32 %v222, %v248
        %v253 = vadd.f32 %v223, %v249
        %v254 = vadd.f32 %v224, %v250
        %v255 = vadd.f32 %v225, %v251
        %v256 = vsel %vm130, %v252, 0.0
        %v257 = vsel %vm131, %v253, 0.0
        %v258 = vsel %vm132, %v254, 0.0
        %v259 = vsel %vm133, %v255, 0.0
        %260 = vrot.lane.b32.xlu0 %v256, 1
        %v261 = vpop.permute.xlu0 %260
        %262 = vrot.lane.b32.xlu0 %v257, 1
        %v263 = vpop.permute.xlu0 %262
        %264 = vrot.lane.b32.xlu0 %v258, 1
        %v265 = vpop.permute.xlu0 %264
        %266 = vrot.lane.b32.xlu0 %v259, 1
        %v267 = vpop.permute.xlu0 %266
        %268 = vrot.lane.b32.xlu0 %v256, 127
        %v269 = vpop.permute.xlu0 %268
        %270 = vrot.lane.b32.xlu0 %v257, 127
        %v271 = vpop.permute.xlu0 %270
        %272 = vrot.lane.b32.xlu0 %v258, 127
        %v273 = vpop.permute.xlu0 %272
        %274 = vrot.lane.b32.xlu0 %v259, 127
        %v275 = vpop.permute.xlu0 %274
        %v276 = vsub.f32 %v261, %v269
        %v277 = vsub.f32 %v263, %v271
        %v278 = vsub.f32 %v265, %v273
        %v279 = vsub.f32 %v267, %v275
        %v280 = vrot.slane %v256, 7
        %v281 = vrot.slane %v257, 7
        %v282 = vrot.slane %v258, 7
        %v283 = vrot.slane %v259, 7
        %v284 = vsel %vm200, %v282, %v283
        %v285 = vsel %vm200, %v281, %v282
        %v286 = vsel %vm200, %v280, %v281
        %v287 = vsel %vm200, %v283, %v280
        %v288 = vrot.slane %v256, 1
        %v289 = vrot.slane %v257, 1
        %v290 = vrot.slane %v258, 1
        %v291 = vrot.slane %v259, 1
        %v292 = vsel %vm209, %v290, %v291
        %v293 = vsel %vm209, %v289, %v290
        %v294 = vsel %vm209, %v288, %v289
        %v295 = vsel %vm209, %v291, %v288
        %v296 = vsub.f32 %v287, %v294
        %v297 = vsub.f32 %v286, %v293
        %v298 = vsub.f32 %v285, %v292
        %v299 = vsub.f32 %v284, %v295
        %v300 = vrot.slane %v276, 7
        %v301 = vrot.slane %v277, 7
        %v302 = vrot.slane %v278, 7
        %v303 = vrot.slane %v279, 7
        %v304 = vsel %vm200, %v302, %v303
        %v305 = vsel %vm200, %v301, %v302
        %v306 = vsel %vm200, %v300, %v301
        %v307 = vsel %vm200, %v303, %v300
        %v308 = vadd.f32 %v276, %v276
        %v309 = vadd.f32 %v277, %v277
        %v310 = vadd.f32 %v278, %v278
        %v311 = vadd.f32 %v279, %v279
        %v312 = vadd.f32 %v307, %v308
        %v313 = vadd.f32 %v306, %v309
        %v314 = vadd.f32 %v305, %v310
        %v315 = vadd.f32 %v304, %v311
        %v316 = vrot.slane %v276, 1
        %v317 = vrot.slane %v277, 1
        %v318 = vrot.slane %v278, 1
        %v319 = vrot.slane %v279, 1
        %v320 = vsel %vm209, %v318, %v319
        %v321 = vsel %vm209, %v317, %v318
        %v322 = vsel %vm209, %v316, %v317
        %v323 = vsel %vm209, %v319, %v316
        %v324 = vadd.f32 %v312, %v322
        %v325 = vadd.f32 %v313, %v321
        %v326 = vadd.f32 %v314, %v320
        %v327 = vadd.f32 %v315, %v323
        %328 = vrot.lane.b32.xlu0 %v296, 1
        %v329 = vpop.permute.xlu0 %328
        %330 = vrot.lane.b32.xlu0 %v297, 1
        %v331 = vpop.permute.xlu0 %330
        %332 = vrot.lane.b32.xlu0 %v298, 1
        %v333 = vpop.permute.xlu0 %332
        %334 = vrot.lane.b32.xlu0 %v299, 1
        %v335 = vpop.permute.xlu0 %334
        %v336 = vadd.f32 %v296, %v296
        %v337 = vadd.f32 %v297, %v297
        %v338 = vadd.f32 %v298, %v298
        %v339 = vadd.f32 %v299, %v299
        %v340 = vadd.f32 %v329, %v336
        %v341 = vadd.f32 %v331, %v337
        %v342 = vadd.f32 %v333, %v338
        %v343 = vadd.f32 %v335, %v339
        %344 = vrot.lane.b32.xlu0 %v296, 127
        %v345 = vpop.permute.xlu0 %344
        %346 = vrot.lane.b32.xlu0 %v297, 127
        %v347 = vpop.permute.xlu0 %346
        %348 = vrot.lane.b32.xlu0 %v298, 127
        %v349 = vpop.permute.xlu0 %348
        %350 = vrot.lane.b32.xlu0 %v299, 127
        %v351 = vpop.permute.xlu0 %350
        %v352 = vadd.f32 %v340, %v345
        %v353 = vadd.f32 %v341, %v347
        %v354 = vadd.f32 %v342, %v349
        %v355 = vadd.f32 %v343, %v351
        %v356 = vmul.f32 %v324, %v324
        %v357 = vmul.f32 %v325, %v325
        %v358 = vmul.f32 %v326, %v326
        %v359 = vmul.f32 %v327, %v327
        %v360 = vmul.f32 %v352, %v352
        %v361 = vmul.f32 %v353, %v353
        %v362 = vmul.f32 %v354, %v354
        %v363 = vmul.f32 %v355, %v355
        %v364 = vadd.f32 %v356, %v360
        %v365 = vadd.f32 %v357, %v361
        %v366 = vadd.f32 %v358, %v362
        %v367 = vadd.f32 %v359, %v363
        %v368 = vrsqrt.pop %v364
        %v369 = vmul.f32 %v364, %v368
        %vm370 = vcmp.eq.f32.partialorder %v364, inf
        %v371 = vsel %vm370, %v364, %v369
        %vm372 = vcmp.eq.f32.partialorder %v364, 0.0
        %v373 = vand.u32 %v364, 2147483648
        %v374 = vsel %vm372, %v373, %v371
        %v375 = vrsqrt.pop %v365
        %v376 = vmul.f32 %v365, %v375
        %vm377 = vcmp.eq.f32.partialorder %v365, inf
        %v378 = vsel %vm377, %v365, %v376
        %vm379 = vcmp.eq.f32.partialorder %v365, 0.0
        %v380 = vand.u32 %v365, 2147483648
        %v381 = vsel %vm379, %v380, %v378
        %v382 = vrsqrt.pop %v366
        %v383 = vmul.f32 %v366, %v382
        %vm384 = vcmp.eq.f32.partialorder %v366, inf
        %v385 = vsel %vm384, %v366, %v383
        %vm386 = vcmp.eq.f32.partialorder %v366, 0.0
        %v387 = vand.u32 %v366, 2147483648
        %v388 = vsel %vm386, %v387, %v385
        %v389 = vrsqrt.pop %v367
        %v390 = vmul.f32 %v367, %v389
        %vm391 = vcmp.eq.f32.partialorder %v367, inf
        %v392 = vsel %vm391, %v367, %v390
        %vm393 = vcmp.eq.f32.partialorder %v367, 0.0
        %v394 = vand.u32 %v367, 2147483648
        %v395 = vsel %vm393, %v394, %v392
        %s396 = sadd.s32 32, %s134
        %s397 = scalar_lea.vmem [#allocation2], %s396
        %v398 = vld [vmem:[%s397] sm:$0xff]
        %v399 = vld [vmem:[%s397 + $0x8] sm:$0xff]
        %v400 = vld [vmem:[%s397 + $0x10] sm:$0xff]
        %v401 = vld [vmem:[%s397 + $0x18] sm:$0xff]
        %402 = vrot.lane.b32.xlu0 %v398, 1
        %v403 = vpop.permute.xlu0 %402
        %404 = vrot.lane.b32.xlu0 %v399, 1
        %v405 = vpop.permute.xlu0 %404
        %406 = vrot.lane.b32.xlu0 %v400, 1
        %v407 = vpop.permute.xlu0 %406
        %408 = vrot.lane.b32.xlu0 %v401, 1
        %v409 = vpop.permute.xlu0 %408
        %410 = vrot.lane.b32.xlu0 %v398, 127
        %v411 = vpop.permute.xlu0 %410
        %412 = vrot.lane.b32.xlu0 %v399, 127
        %v413 = vpop.permute.xlu0 %412
        %414 = vrot.lane.b32.xlu0 %v400, 127
        %v415 = vpop.permute.xlu0 %414
        %416 = vrot.lane.b32.xlu0 %v401, 127
        %v417 = vpop.permute.xlu0 %416
        %v418 = vadd.f32 %v403, %v411
        %v419 = vadd.f32 %v405, %v413
        %v420 = vadd.f32 %v407, %v415
        %v421 = vadd.f32 %v409, %v417
        %v422 = vmul.f32 %v418, 0.60653067
        %v423 = vmul.f32 %v419, 0.60653067
        %v424 = vmul.f32 %v420, 0.60653067
        %v425 = vmul.f32 %v421, 0.60653067
        %v426 = vadd.f32 %v398, %v422
        %v427 = vadd.f32 %v399, %v423
        %v428 = vadd.f32 %v400, %v424
        %v429 = vadd.f32 %v401, %v425
        %430 = vrot.lane.b32.xlu0 %v398, 2
        %v431 = vpop.permute.xlu0 %430
        %432 = vrot.lane.b32.xlu0 %v399, 2
        %v433 = vpop.permute.xlu0 %432
        %434 = vrot.lane.b32.xlu0 %v400, 2
        %v435 = vpop.permute.xlu0 %434
        %436 = vrot.lane.b32.xlu0 %v401, 2
        %v437 = vpop.permute.xlu0 %436
        %438 = vrot.lane.b32.xlu0 %v398, 126
        %v439 = vpop.permute.xlu0 %438
        %440 = vrot.lane.b32.xlu0 %v399, 126
        %v441 = vpop.permute.xlu0 %440
        %442 = vrot.lane.b32.xlu0 %v400, 126
        %v443 = vpop.permute.xlu0 %442
        %444 = vrot.lane.b32.xlu0 %v401, 126
        %v445 = vpop.permute.xlu0 %444
        %v446 = vadd.f32 %v431, %v439
        %v447 = vadd.f32 %v433, %v441
        %v448 = vadd.f32 %v435, %v443
        %v449 = vadd.f32 %v437, %v445
        %v450 = vmul.f32 %v446, 0.13533528
        %v451 = vmul.f32 %v447, 0.13533528
        %v452 = vmul.f32 %v448, 0.13533528
        %v453 = vmul.f32 %v449, 0.13533528
        %v454 = vadd.f32 %v426, %v450
        %v455 = vadd.f32 %v427, %v451
        %v456 = vadd.f32 %v428, %v452
        %v457 = vadd.f32 %v429, %v453
        %v458 = vrot.slane %v454, 7
        %v459 = vrot.slane %v455, 7
        %v460 = vrot.slane %v456, 7
        %v461 = vrot.slane %v457, 7
        %v462 = vsel %vm200, %v460, %v461
        %v463 = vsel %vm200, %v459, %v460
        %v464 = vsel %vm200, %v458, %v459
        %v465 = vsel %vm200, %v461, %v458
        %v466 = vrot.slane %v454, 1
        %v467 = vrot.slane %v455, 1
        %v468 = vrot.slane %v456, 1
        %v469 = vrot.slane %v457, 1
        %v470 = vsel %vm209, %v468, %v469
        %v471 = vsel %vm209, %v467, %v468
        %v472 = vsel %vm209, %v466, %v467
        %v473 = vsel %vm209, %v469, %v466
        %v474 = vadd.f32 %v465, %v472
        %v475 = vadd.f32 %v464, %v471
        %v476 = vadd.f32 %v463, %v470
        %v477 = vadd.f32 %v462, %v473
        %v478 = vmul.f32 %v474, 0.60653067
        %v479 = vmul.f32 %v475, 0.60653067
        %v480 = vmul.f32 %v476, 0.60653067
        %v481 = vmul.f32 %v477, 0.60653067
        %v482 = vadd.f32 %v454, %v478
        %v483 = vadd.f32 %v455, %v479
        %v484 = vadd.f32 %v456, %v480
        %v485 = vadd.f32 %v457, %v481
        %v486 = vrot.slane %v454, 6
        %v487 = vrot.slane %v455, 6
        %v488 = vrot.slane %v456, 6
        %v489 = vrot.slane %v457, 6
        %v490 = vsel %vm230, %v488, %v489
        %v491 = vsel %vm230, %v487, %v488
        %v492 = vsel %vm230, %v486, %v487
        %v493 = vsel %vm230, %v489, %v486
        %v494 = vrot.slane %v454, 2
        %v495 = vrot.slane %v455, 2
        %v496 = vrot.slane %v456, 2
        %v497 = vrot.slane %v457, 2
        %v498 = vsel %vm239, %v496, %v497
        %v499 = vsel %vm239, %v495, %v496
        %v500 = vsel %vm239, %v494, %v495
        %v501 = vsel %vm239, %v497, %v494
        %v502 = vadd.f32 %v493, %v500
        %v503 = vadd.f32 %v492, %v499
        %v504 = vadd.f32 %v491, %v498
        %v505 = vadd.f32 %v490, %v501
        %v506 = vmul.f32 %v502, 0.13533528
        %v507 = vmul.f32 %v503, 0.13533528
        %v508 = vmul.f32 %v504, 0.13533528
        %v509 = vmul.f32 %v505, 0.13533528
        %v510 = vadd.f32 %v482, %v506
        %v511 = vadd.f32 %v483, %v507
        %v512 = vadd.f32 %v484, %v508
        %v513 = vadd.f32 %v485, %v509
        %v514 = vsel %vm130, %v510, 0.0
        %v515 = vsel %vm131, %v511, 0.0
        %v516 = vsel %vm132, %v512, 0.0
        %v517 = vsel %vm133, %v513, 0.0
        %518 = vrot.lane.b32.xlu0 %v514, 1
        %v519 = vpop.permute.xlu0 %518
        %520 = vrot.lane.b32.xlu0 %v515, 1
        %v521 = vpop.permute.xlu0 %520
        %522 = vrot.lane.b32.xlu0 %v516, 1
        %v523 = vpop.permute.xlu0 %522
        %524 = vrot.lane.b32.xlu0 %v517, 1
        %v525 = vpop.permute.xlu0 %524
        %526 = vrot.lane.b32.xlu0 %v514, 127
        %v527 = vpop.permute.xlu0 %526
        %528 = vrot.lane.b32.xlu0 %v515, 127
        %v529 = vpop.permute.xlu0 %528
        %530 = vrot.lane.b32.xlu0 %v516, 127
        %v531 = vpop.permute.xlu0 %530
        %532 = vrot.lane.b32.xlu0 %v517, 127
        %v533 = vpop.permute.xlu0 %532
        %v534 = vsub.f32 %v519, %v527
        %v535 = vsub.f32 %v521, %v529
        %v536 = vsub.f32 %v523, %v531
        %v537 = vsub.f32 %v525, %v533
        %v538 = vrot.slane %v514, 7
        %v539 = vrot.slane %v515, 7
        %v540 = vrot.slane %v516, 7
        %v541 = vrot.slane %v517, 7
        %v542 = vsel %vm200, %v540, %v541
        %v543 = vsel %vm200, %v539, %v540
        %v544 = vsel %vm200, %v538, %v539
        %v545 = vsel %vm200, %v541, %v538
        %v546 = vrot.slane %v514, 1
        %v547 = vrot.slane %v515, 1
        %v548 = vrot.slane %v516, 1
        %v549 = vrot.slane %v517, 1
        %v550 = vsel %vm209, %v548, %v549
        %v551 = vsel %vm209, %v547, %v548
        %v552 = vsel %vm209, %v546, %v547
        %v553 = vsel %vm209, %v549, %v546
        %v554 = vsub.f32 %v545, %v552
        %v555 = vsub.f32 %v544, %v551
        %v556 = vsub.f32 %v543, %v550
        %v557 = vsub.f32 %v542, %v553
        %v558 = vrot.slane %v534, 7
        %v559 = vrot.slane %v535, 7
        %v560 = vrot.slane %v536, 7
        %v561 = vrot.slane %v537, 7
        %v562 = vsel %vm200, %v560, %v561
        %v563 = vsel %vm200, %v559, %v560
        %v564 = vsel %vm200, %v558, %v559
        %v565 = vsel %vm200, %v561, %v558
        %v566 = vadd.f32 %v534, %v534
        %v567 = vadd.f32 %v535, %v535
        %v568 = vadd.f32 %v536, %v536
        %v569 = vadd.f32 %v537, %v537
        %v570 = vadd.f32 %v565, %v566
        %v571 = vadd.f32 %v564, %v567
        %v572 = vadd.f32 %v563, %v568
        %v573 = vadd.f32 %v562, %v569
        %v574 = vrot.slane %v534, 1
        %v575 = vrot.slane %v535, 1
        %v576 = vrot.slane %v536, 1
        %v577 = vrot.slane %v537, 1
        %v578 = vsel %vm209, %v576, %v577
        %v579 = vsel %vm209, %v575, %v576
        %v580 = vsel %vm209, %v574, %v575
        %v581 = vsel %vm209, %v577, %v574
        %v582 = vadd.f32 %v570, %v580
        %v583 = vadd.f32 %v571, %v579
        %v584 = vadd.f32 %v572, %v578
        %v585 = vadd.f32 %v573, %v581
        %586 = vrot.lane.b32.xlu0 %v554, 1
        %v587 = vpop.permute.xlu0 %586
        %588 = vrot.lane.b32.xlu0 %v555, 1
        %v589 = vpop.permute.xlu0 %588
        %590 = vrot.lane.b32.xlu0 %v556, 1
        %v591 = vpop.permute.xlu0 %590
        %592 = vrot.lane.b32.xlu0 %v557, 1
        %v593 = vpop.permute.xlu0 %592
        %v594 = vadd.f32 %v554, %v554
        %v595 = vadd.f32 %v555, %v555
        %v596 = vadd.f32 %v556, %v556
        %v597 = vadd.f32 %v557, %v557
        %v598 = vadd.f32 %v587, %v594
        %v599 = vadd.f32 %v589, %v595
        %v600 = vadd.f32 %v591, %v596
        %v601 = vadd.f32 %v593, %v597
        %602 = vrot.lane.b32.xlu0 %v554, 127
        %v603 = vpop.permute.xlu0 %602
        %604 = vrot.lane.b32.xlu0 %v555, 127
        %v605 = vpop.permute.xlu0 %604
        %606 = vrot.lane.b32.xlu0 %v556, 127
        %v607 = vpop.permute.xlu0 %606
        %608 = vrot.lane.b32.xlu0 %v557, 127
        %v609 = vpop.permute.xlu0 %608
        %v610 = vadd.f32 %v598, %v603
        %v611 = vadd.f32 %v599, %v605
        %v612 = vadd.f32 %v600, %v607
        %v613 = vadd.f32 %v601, %v609
        %v614 = vmul.f32 %v582, %v582
        %v615 = vmul.f32 %v583, %v583
        %v616 = vmul.f32 %v584, %v584
        %v617 = vmul.f32 %v585, %v585
        %v618 = vmul.f32 %v610, %v610
        %v619 = vmul.f32 %v611, %v611
        %v620 = vmul.f32 %v612, %v612
        %v621 = vmul.f32 %v613, %v613
        %v622 = vadd.f32 %v614, %v618
        %v623 = vadd.f32 %v615, %v619
        %v624 = vadd.f32 %v616, %v620
        %v625 = vadd.f32 %v617, %v621
        %v626 = vrsqrt.pop %v622
        %v627 = vmul.f32 %v622, %v626
        %vm628 = vcmp.eq.f32.partialorder %v622, inf
        %v629 = vsel %vm628, %v622, %v627
        %vm630 = vcmp.eq.f32.partialorder %v622, 0.0
        %v631 = vand.u32 %v622, 2147483648
        %v632 = vsel %vm630, %v631, %v629
        %v633 = vrsqrt.pop %v623
        %v634 = vmul.f32 %v623, %v633
        %vm635 = vcmp.eq.f32.partialorder %v623, inf
        %v636 = vsel %vm635, %v623, %v634
        %vm637 = vcmp.eq.f32.partialorder %v623, 0.0
        %v638 = vand.u32 %v623, 2147483648
        %v639 = vsel %vm637, %v638, %v636
        %v640 = vrsqrt.pop %v624
        %v641 = vmul.f32 %v624, %v640
        %vm642 = vcmp.eq.f32.partialorder %v624, inf
        %v643 = vsel %vm642, %v624, %v641
        %vm644 = vcmp.eq.f32.partialorder %v624, 0.0
        %v645 = vand.u32 %v624, 2147483648
        %v646 = vsel %vm644, %v645, %v643
        %v647 = vrsqrt.pop %v625
        %v648 = vmul.f32 %v625, %v647
        %vm649 = vcmp.eq.f32.partialorder %v625, inf
        %v650 = vsel %vm649, %v625, %v648
        %vm651 = vcmp.eq.f32.partialorder %v625, 0.0
        %v652 = vand.u32 %v625, 2147483648
        %v653 = vsel %vm651, %v652, %v650
        %v654 = vadd.f32 %v374, %v632
        %v655 = vadd.f32 %v381, %v639
        %v656 = vadd.f32 %v388, %v646
        %v657 = vadd.f32 %v395, %v653
        %v658 = vadd.f32 %v325, %v583
        %v659 = vadd.f32 %v326, %v584
        %v660 = vadd.f32 %v353, %v611
        %v661 = vadd.f32 %v354, %v612
        %s662 = sadd.s32 64, %s134
        %s663 = scalar_lea.vmem [#allocation2], %s662
        %v664 = vld [vmem:[%s663] sm:$0xff]
        %v665 = vld [vmem:[%s663 + $0x8] sm:$0xff]
        %v666 = vld [vmem:[%s663 + $0x10] sm:$0xff]
        %v667 = vld [vmem:[%s663 + $0x18] sm:$0xff]
        %668 = vrot.lane.b32.xlu0 %v664, 1
        %v669 = vpop.permute.xlu0 %668
        %670 = vrot.lane.b32.xlu0 %v665, 1
        %v671 = vpop.permute.xlu0 %670
        %672 = vrot.lane.b32.xlu0 %v666, 1
        %v673 = vpop.permute.xlu0 %672
        %674 = vrot.lane.b32.xlu0 %v667, 1
        %v675 = vpop.permute.xlu0 %674
        %676 = vrot.lane.b32.xlu0 %v664, 127
        %v677 = vpop.permute.xlu0 %676
        %678 = vrot.lane.b32.xlu0 %v665, 127
        %v679 = vpop.permute.xlu0 %678
        %680 = vrot.lane.b32.xlu0 %v666, 127
        %v681 = vpop.permute.xlu0 %680
        %682 = vrot.lane.b32.xlu0 %v667, 127
        %v683 = vpop.permute.xlu0 %682
        %v684 = vadd.f32 %v669, %v677
        %v685 = vadd.f32 %v671, %v679
        %v686 = vadd.f32 %v673, %v681
        %v687 = vadd.f32 %v675, %v683
        %v688 = vmul.f32 %v684, 0.60653067
        %v689 = vmul.f32 %v685, 0.60653067
        %v690 = vmul.f32 %v686, 0.60653067
        %v691 = vmul.f32 %v687, 0.60653067
        %v692 = vadd.f32 %v664, %v688
        %v693 = vadd.f32 %v665, %v689
        %v694 = vadd.f32 %v666, %v690
        %v695 = vadd.f32 %v667, %v691
        %696 = vrot.lane.b32.xlu0 %v664, 2
        %v697 = vpop.permute.xlu0 %696
        %698 = vrot.lane.b32.xlu0 %v665, 2
        %v699 = vpop.permute.xlu0 %698
        %700 = vrot.lane.b32.xlu0 %v666, 2
        %v701 = vpop.permute.xlu0 %700
        %702 = vrot.lane.b32.xlu0 %v667, 2
        %v703 = vpop.permute.xlu0 %702
        %704 = vrot.lane.b32.xlu0 %v664, 126
        %v705 = vpop.permute.xlu0 %704
        %706 = vrot.lane.b32.xlu0 %v665, 126
        %v707 = vpop.permute.xlu0 %706
        %708 = vrot.lane.b32.xlu0 %v666, 126
        %v709 = vpop.permute.xlu0 %708
        %710 = vrot.lane.b32.xlu0 %v667, 126
        %v711 = vpop.permute.xlu0 %710
        %v712 = vadd.f32 %v697, %v705
        %v713 = vadd.f32 %v699, %v707
        %v714 = vadd.f32 %v701, %v709
        %v715 = vadd.f32 %v703, %v711
        %v716 = vmul.f32 %v712, 0.13533528
        %v717 = vmul.f32 %v713, 0.13533528
        %v718 = vmul.f32 %v714, 0.13533528
        %v719 = vmul.f32 %v715, 0.13533528
        %v720 = vadd.f32 %v692, %v716
        %v721 = vadd.f32 %v693, %v717
        %v722 = vadd.f32 %v694, %v718
        %v723 = vadd.f32 %v695, %v719
        %v724 = vrot.slane %v720, 7
        %v725 = vrot.slane %v721, 7
        %v726 = vrot.slane %v722, 7
        %v727 = vrot.slane %v723, 7
        %v728 = vsel %vm200, %v726, %v727
        %v729 = vsel %vm200, %v725, %v726
        %v730 = vsel %vm200, %v724, %v725
        %v731 = vsel %vm200, %v727, %v724
        %v732 = vrot.slane %v720, 1
        %v733 = vrot.slane %v721, 1
        %v734 = vrot.slane %v722, 1
        %v735 = vrot.slane %v723, 1
        %v736 = vsel %vm209, %v734, %v735
        %v737 = vsel %vm209, %v733, %v734
        %v738 = vsel %vm209, %v732, %v733
        %v739 = vsel %vm209, %v735, %v732
        %v740 = vadd.f32 %v731, %v738
        %v741 = vadd.f32 %v730, %v737
        %v742 = vadd.f32 %v729, %v736
        %v743 = vadd.f32 %v728, %v739
        %v744 = vmul.f32 %v740, 0.60653067
        %v745 = vmul.f32 %v741, 0.60653067
        %v746 = vmul.f32 %v742, 0.60653067
        %v747 = vmul.f32 %v743, 0.60653067
        %v748 = vadd.f32 %v720, %v744
        %v749 = vadd.f32 %v721, %v745
        %v750 = vadd.f32 %v722, %v746
        %v751 = vadd.f32 %v723, %v747
        %v752 = vrot.slane %v720, 6
        %v753 = vrot.slane %v721, 6
        %v754 = vrot.slane %v722, 6
        %v755 = vrot.slane %v723, 6
        %v756 = vsel %vm230, %v754, %v755
        %v757 = vsel %vm230, %v753, %v754
        %v758 = vsel %vm230, %v752, %v753
        %v759 = vsel %vm230, %v755, %v752
        %v760 = vrot.slane %v720, 2
        %v761 = vrot.slane %v721, 2
        %v762 = vrot.slane %v722, 2
        %v763 = vrot.slane %v723, 2
        %v764 = vsel %vm239, %v762, %v763
        %v765 = vsel %vm239, %v761, %v762
        %v766 = vsel %vm239, %v760, %v761
        %v767 = vsel %vm239, %v763, %v760
        %v768 = vadd.f32 %v759, %v766
        %v769 = vadd.f32 %v758, %v765
        %v770 = vadd.f32 %v757, %v764
        %v771 = vadd.f32 %v756, %v767
        %v772 = vmul.f32 %v768, 0.13533528
        %v773 = vmul.f32 %v769, 0.13533528
        %v774 = vmul.f32 %v770, 0.13533528
        %v775 = vmul.f32 %v771, 0.13533528
        %v776 = vadd.f32 %v748, %v772
        %v777 = vadd.f32 %v749, %v773
        %v778 = vadd.f32 %v750, %v774
        %v779 = vadd.f32 %v751, %v775
        %v780 = vsel %vm130, %v776, 0.0
        %v781 = vsel %vm131, %v777, 0.0
        %v782 = vsel %vm132, %v778, 0.0
        %v783 = vsel %vm133, %v779, 0.0
        %784 = vrot.lane.b32.xlu0 %v780, 1
        %v785 = vpop.permute.xlu0 %784
        %786 = vrot.lane.b32.xlu0 %v781, 1
        %v787 = vpop.permute.xlu0 %786
        %788 = vrot.lane.b32.xlu0 %v782, 1
        %v789 = vpop.permute.xlu0 %788
        %790 = vrot.lane.b32.xlu0 %v783, 1
        %v791 = vpop.permute.xlu0 %790
        %792 = vrot.lane.b32.xlu0 %v780, 127
        %v793 = vpop.permute.xlu0 %792
        %794 = vrot.lane.b32.xlu0 %v781, 127
        %v795 = vpop.permute.xlu0 %794
        %796 = vrot.lane.b32.xlu0 %v782, 127
        %v797 = vpop.permute.xlu0 %796
        %798 = vrot.lane.b32.xlu0 %v783, 127
        %v799 = vpop.permute.xlu0 %798
        %v800 = vsub.f32 %v785, %v793
        %v801 = vsub.f32 %v787, %v795
        %v802 = vsub.f32 %v789, %v797
        %v803 = vsub.f32 %v791, %v799
        %v804 = vrot.slane %v780, 7
        %v805 = vrot.slane %v781, 7
        %v806 = vrot.slane %v782, 7
        %v807 = vrot.slane %v783, 7
        %v808 = vsel %vm200, %v806, %v807
        %v809 = vsel %vm200, %v805, %v806
        %v810 = vsel %vm200, %v804, %v805
        %v811 = vsel %vm200, %v807, %v804
        %v812 = vrot.slane %v780, 1
        %v813 = vrot.slane %v781, 1
        %v814 = vrot.slane %v782, 1
        %v815 = vrot.slane %v783, 1
        %v816 = vsel %vm209, %v814, %v815
        %v817 = vsel %vm209, %v813, %v814
        %v818 = vsel %vm209, %v812, %v813
        %v819 = vsel %vm209, %v815, %v812
        %v820 = vsub.f32 %v811, %v818
        %v821 = vsub.f32 %v810, %v817
        %v822 = vsub.f32 %v809, %v816
        %v823 = vsub.f32 %v808, %v819
        %v824 = vrot.slane %v800, 7
        %v825 = vrot.slane %v801, 7
        %v826 = vrot.slane %v802, 7
        %v827 = vrot.slane %v803, 7
        %v828 = vsel %vm200, %v826, %v827
        %v829 = vsel %vm200, %v825, %v826
        %v830 = vsel %vm200, %v824, %v825
        %v831 = vsel %vm200, %v827, %v824
        %v832 = vadd.f32 %v800, %v800
        %v833 = vadd.f32 %v801, %v801
        %v834 = vadd.f32 %v802, %v802
        %v835 = vadd.f32 %v803, %v803
        %v836 = vadd.f32 %v831, %v832
        %v837 = vadd.f32 %v830, %v833
        %v838 = vadd.f32 %v829, %v834
        %v839 = vadd.f32 %v828, %v835
        %v840 = vrot.slane %v800, 1
        %v841 = vrot.slane %v801, 1
        %v842 = vrot.slane %v802, 1
        %v843 = vrot.slane %v803, 1
        %v844 = vsel %vm209, %v842, %v843
        %v845 = vsel %vm209, %v841, %v842
        %v846 = vsel %vm209, %v840, %v841
        %v847 = vsel %vm209, %v843, %v840
        %v848 = vadd.f32 %v836, %v846
        %v849 = vadd.f32 %v837, %v845
        %v850 = vadd.f32 %v838, %v844
        %v851 = vadd.f32 %v839, %v847
        %852 = vrot.lane.b32.xlu0 %v820, 1
        %v853 = vpop.permute.xlu0 %852
        %854 = vrot.lane.b32.xlu0 %v821, 1
        %v855 = vpop.permute.xlu0 %854
        %856 = vrot.lane.b32.xlu0 %v822, 1
        %v857 = vpop.permute.xlu0 %856
        %858 = vrot.lane.b32.xlu0 %v823, 1
        %v859 = vpop.permute.xlu0 %858
        %v860 = vadd.f32 %v820, %v820
        %v861 = vadd.f32 %v821, %v821
        %v862 = vadd.f32 %v822, %v822
        %v863 = vadd.f32 %v823, %v823
        %v864 = vadd.f32 %v853, %v860
        %v865 = vadd.f32 %v855, %v861
        %v866 = vadd.f32 %v857, %v862
        %v867 = vadd.f32 %v859, %v863
        %868 = vrot.lane.b32.xlu0 %v820, 127
        %v869 = vpop.permute.xlu0 %868
        %870 = vrot.lane.b32.xlu0 %v821, 127
        %v871 = vpop.permute.xlu0 %870
        %872 = vrot.lane.b32.xlu0 %v822, 127
        %v873 = vpop.permute.xlu0 %872
        %874 = vrot.lane.b32.xlu0 %v823, 127
        %v875 = vpop.permute.xlu0 %874
        %v876 = vadd.f32 %v864, %v869
        %v877 = vadd.f32 %v865, %v871
        %v878 = vadd.f32 %v866, %v873
        %v879 = vadd.f32 %v867, %v875
        %v880 = vmul.f32 %v848, %v848
        %v881 = vmul.f32 %v849, %v849
        %v882 = vmul.f32 %v850, %v850
        %v883 = vmul.f32 %v851, %v851
        %v884 = vmul.f32 %v876, %v876
        %v885 = vmul.f32 %v877, %v877
        %v886 = vmul.f32 %v878, %v878
        %v887 = vmul.f32 %v879, %v879
        %v888 = vadd.f32 %v880, %v884
        %v889 = vadd.f32 %v881, %v885
        %v890 = vadd.f32 %v882, %v886
        %v891 = vadd.f32 %v883, %v887
        %v892 = vrsqrt.pop %v888
        %v893 = vmul.f32 %v888, %v892
        %vm894 = vcmp.eq.f32.partialorder %v888, inf
        %v895 = vsel %vm894, %v888, %v893
        %vm896 = vcmp.eq.f32.partialorder %v888, 0.0
        %v897 = vand.u32 %v888, 2147483648
        %v898 = vsel %vm896, %v897, %v895
        %v899 = vrsqrt.pop %v889
        %v900 = vmul.f32 %v889, %v899
        %vm901 = vcmp.eq.f32.partialorder %v889, inf
        %v902 = vsel %vm901, %v889, %v900
        %vm903 = vcmp.eq.f32.partialorder %v889, 0.0
        %v904 = vand.u32 %v889, 2147483648
        %v905 = vsel %vm903, %v904, %v902
        %v906 = vrsqrt.pop %v890
        %v907 = vmul.f32 %v890, %v906
        %vm908 = vcmp.eq.f32.partialorder %v890, inf
        %v909 = vsel %vm908, %v890, %v907
        %vm910 = vcmp.eq.f32.partialorder %v890, 0.0
        %v911 = vand.u32 %v890, 2147483648
        %v912 = vsel %vm910, %v911, %v909
        %v913 = vrsqrt.pop %v891
        %v914 = vmul.f32 %v891, %v913
        %vm915 = vcmp.eq.f32.partialorder %v891, inf
        %v916 = vsel %vm915, %v891, %v914
        %vm917 = vcmp.eq.f32.partialorder %v891, 0.0
        %v918 = vand.u32 %v891, 2147483648
        %v919 = vsel %vm917, %v918, %v916
        %v920 = vadd.f32 %v654, %v898
        %v921 = vadd.f32 %v655, %v905
        %v922 = vadd.f32 %v656, %v912
        %v923 = vadd.f32 %v657, %v919
        %v924 = vadd.f32 %v658, %v849
        %v925 = vadd.f32 %v659, %v850
        %v926 = vadd.f32 %v660, %v877
        %v927 = vadd.f32 %v661, %v878
        %v928 = vsel %vm130, %v920, 0.0
        %v929 = vsel %vm131, %v921, 0.0
        %v930 = vsel %vm132, %v922, 0.0
        %v931 = vsel %vm133, %v923, 0.0
        %932 = vrot.lane.b32.xlu0 %v928, 127
        %v933 = vpop.permute.xlu0 %932
        %934 = vrot.lane.b32.xlu0 %v929, 127
        %v935 = vpop.permute.xlu0 %934
        %936 = vrot.lane.b32.xlu0 %v930, 127
        %v937 = vpop.permute.xlu0 %936
        %938 = vrot.lane.b32.xlu0 %v931, 127
        %v939 = vpop.permute.xlu0 %938
        %940 = vrot.lane.b32.xlu0 %v928, 1
        %v941 = vpop.permute.xlu0 %940
        %942 = vrot.lane.b32.xlu0 %v929, 1
        %v943 = vpop.permute.xlu0 %942
        %944 = vrot.lane.b32.xlu0 %v930, 1
        %v945 = vpop.permute.xlu0 %944
        %946 = vrot.lane.b32.xlu0 %v931, 1
        %v947 = vpop.permute.xlu0 %946
        %v948 = vrot.slane %v929, 1
        %v949 = vrot.slane %v930, 1
        %v950 = vrot.slane %v931, 1
        %v951 = vsel %vm209, %v949, %v950
        %v952 = vsel %vm209, %v948, %v949
        %v953 = vrot.slane %v928, 7
        %v954 = vrot.slane %v929, 7
        %v955 = vrot.slane %v930, 7
        %v956 = vsel %vm200, %v954, %v955
        %v957 = vsel %vm200, %v953, %v954
        %v958 = vrot.slane %v935, 1
        %v959 = vrot.slane %v937, 1
        %v960 = vrot.slane %v939, 1
        %v961 = vsel %vm209, %v959, %v960
        %v962 = vsel %vm209, %v958, %v959
        %v963 = vrot.slane %v933, 7
        %v964 = vrot.slane %v935, 7
        %v965 = vrot.slane %v937, 7
        %v966 = vsel %vm200, %v964, %v965
        %v967 = vsel %vm200, %v963, %v964
        %v968 = vrot.slane %v943, 1
        %v969 = vrot.slane %v945, 1
        %v970 = vrot.slane %v947, 1
        %v971 = vsel %vm209, %v969, %v970
        %v972 = vsel %vm209, %v968, %v969
        %v973 = vrot.slane %v941, 7
        %v974 = vrot.slane %v943, 7
        %v975 = vrot.slane %v945, 7
        %v976 = vsel %vm200, %v974, %v975
        %v977 = vsel %vm200, %v973, %v974
        %v978 = vmax.f32 %v935, %v943
        %v979 = vmax.f32 %v937, %v945
        %v980 = vmax.f32 %v952, %v957
        %v981 = vmax.f32 %v951, %v956
        %v982 = vmax.f32 %v962, %v977
        %v983 = vmax.f32 %v961, %v976
        %v984 = vmax.f32 %v972, %v967
        %v985 = vmax.f32 %v971, %v966
        %v986 = vand.u32 2147483647, %v924
        %v987 = vand.u32 2147483647, %v925
        %v988 = vand.u32 2147483647, %v926
        %v989 = vand.u32 2147483647, %v927
        %v990 = vmul.f32 %v986, 0.41421357
        %v991 = vmul.f32 %v987, 0.41421357
        %vm992 = vcmp.le.f32.partialorder %v988, %v990
        %vm993 = vcmp.le.f32.partialorder %v989, %v991
        %v994 = vmul.f32 %v988, 0.41421357
        %v995 = vmul.f32 %v989, 0.41421357
        %vm996 = vcmp.lt.f32.partialorder %v986, %v994
        %vm997 = vcmp.lt.f32.partialorder %v987, %v995
        %vm998 = vcmp.gt.f32.partialorder %v926, 0.0
        %vm999 = vcmp.gt.f32.partialorder %v927, 0.0
        %vm1000 = vcmp.gt.f32.partialorder %v924, 0.0
        %vm1001 = vcmp.gt.f32.partialorder %v925, 0.0
        %vm1002 = vmxor %vm998, %vm1000
        %vm1003 = vmxor %vm999, %vm1001
        %vm1004 = vmxor %vm1002, 1
        %vm1005 = vmxor %vm1003, 1
        %v1006 = vsel %vm1004, %v982, %v984
        %v1007 = vsel %vm1005, %v983, %v985
        %v1008 = vsel %vm996, %v980, %v1006
        %v1009 = vsel %vm997, %v981, %v1007
        %v1010 = vsel %vm992, %v978, %v1008
        %v1011 = vsel %vm993, %v979, %v1009
        %vm1012 = vcmp.gt.f32.partialorder %v929, %v1010
        %vm1013 = vcmp.gt.f32.partialorder %v930, %v1011
        %vm1014 = vcmp.ge.f32.partialorder %v929, 10.0
        %vm1015 = vcmp.ge.f32.partialorder %v930, 10.0
        %vm1016 = vmand %vm1012, %vm1014
        %vm1017 = vmand %vm1013, %vm1015
        %v1018 = vsel %vm1016, %v929, 0.0
        %v1019 = vsel %vm1017, %v930, 0.0
        %1020 = vst [vmem:[%s58] sm:$0xff] %v1018
        %1021 = vst [vmem:[%s58 + $0x8] sm:$0xff] %v1019
        %s1022 = sand.u32 %s31, 1
        %s1023 = scalar_lea.sflag [#allocation5], %s1022
        %s1024 = sand.u32 %s31, 1
        %s1025 = smul.addr %s1024, 16
        %s1026 = scalar_lea.vmem [#allocation4], %s1025
        // Predicated region
        $region17: #{tpu_custom_call.1} parent=11 // pred_check
          %p1027 = pneg %p37
        $region18: #{tpu_custom_call.1} parent=11 // pred_check_branch
          %1029 = sbr.rel (%p1027) target = $region20
        $region19: #{tpu_custom_call.1} parent=11 // pred_region
          %s1030 = smul.u32 2, %s17
          %s1032 = ssub.s32 256, 256
          %1033 = vsyncadd %s1023, %s1032
          %s1034 = smul.addr %s16, 2
          %s1035 = sadd.s32 %s1030, %s1034
          %s1036 = smul.addr %s1035, 128
          %s1037 = scalar_lea.hbm %s1, %s1036
          %s1038 = sshll.u32 %s1026, 4
          %s1039 = int_to_ptr.vmem [resolvable:$true] %s1038
          %1044 = dma.vmem_to_hbm [thread:$0]  %s1039, 256, %s1037, %s1023, 128, 128, 8
        $region20: #{tpu_custom_call.1} parent=11 // pred_fallthru
          _
      $region12: #{tpu_custom_call.1} parent=5 // pred_fallthru
        _
      %p1045 = scmp.le.s32.totalorder 1, %s10
      // Predicated region
      $region21: #{tpu_custom_call.1} parent=5 // pred_check
        %p1046 = pneg %p1045
      $region22: #{tpu_custom_call.1} parent=5 // pred_check_branch
        %1048 = sbr.rel (%p1046) target = $region24
      $region23: #{tpu_custom_call.1} parent=5 // pred_region
        %s1049 = ssub.s32 %s10, 1
        // Predicated region
        $region25: #{tpu_custom_call.1} parent=23 // pred_check
          %p1050 = pneg %p43
        $region26: #{tpu_custom_call.1} parent=23 // pred_check_branch
          %1052 = sbr.rel (%p1050) target = $region28
        $region27: #{tpu_custom_call.1} parent=23 // pred_region
          %s1053 = sand.u32 %s34, 1
          %s1054 = scalar_lea.sflag [#allocation5], %s1053
          %s1055 = sand.u32 %s34, 1
          %s1056 = smul.addr %s1055, 16
          %s1057 = scalar_lea.vmem [#allocation4], %s1056
          %1058 = dma.done %s1054, 256
        $region28: #{tpu_custom_call.1} parent=23 // pred_fallthru
          _
      $region24: #{tpu_custom_call.1} parent=5 // pred_fallthru
        _
    $region6: #{tpu_custom_call.1} parent=1 // loop_footer
      %s14 = sadd.s32 1, %s10
    $region7: #{tpu_custom_call.1} parent=1 // loop_footer_branch
      %9 = sbr.rel target = $region3
    $region8: #{tpu_custom_call.1} parent=1 // loop_exit
      _
    %1059 = vsyncpa [#allocation5], 1
    %s1060 = scalar_lea.sflag [#allocation5], 1
    %1061 = vsyncpa %s1060, 1
  %1062 = vsyncmov [#allocation3]
  %s1063 = vpop.sfrf %1062
  %p1064 = scmp.eq.s32.totalorder %s1063, 0
  %p1065 = pneg %p1064
  %1067 = shalt.err (%p1065)
  %s1068 = scalar_lea.sflag [#allocation3], 1
  %1069 = vsyncmov %s1068
  %s1070 = vpop.sfrf %1069
  %p1071 = scmp.eq.s32.totalorder %s1070, 0
  %p1072 = pneg %p1071
  %1074 = shalt.err (%p1072)

</llo_original>
